<compile_context>
chip_gen: v7x
topology: tpu7x:2x2x1
jax: 0.10.0
libtpu: 0.0.40
codegen_flags: <defaults>
</compile_context>

<pallas_src>
import functools
import math

import numpy as np
import jax
import jax.numpy as jnp
from jax import lax
from jax.experimental import pallas as pl
from jax.experimental.pallas import tpu as pltpu


# ---------------------------------------------------------------------------
# Pallas kernel bodies
# ---------------------------------------------------------------------------
def _sum_axbt_kernel(a_ref, x_ref, b_ref, o_ref, *, nb, g_blk, bias):
    """o[n] = bias + sum_g A[g] @ X[n] @ B[g]^T, accumulated over the g grid axis.

    a_ref : (g_blk, P, M) bf16   0/1 shift operators for the current g block
    x_ref : (nb, M, K)    bf16   whole batch, resident across the grid
    b_ref : (g_blk, Q, K) bf16   banded kernel operators
    o_ref : (nb, P, Q)    f32    accumulator; block index constant across g
    """
    @pl.when(pl.program_id(0) == 0)
    def _():
        o_ref[...] = jnp.full(o_ref.shape, bias, o_ref.dtype)

    for n in range(nb):                                   # small static batch loop
        x = x_ref[n]                                      # (M, K) bf16
        for g in range(g_blk):                            # per-g accumulate into VMEM
            ax = jnp.dot(a_ref[g], x, preferred_element_type=jnp.float32)   # (P, K)
            o_ref[n] += lax.dot_general(
                ax.astype(jnp.bfloat16), b_ref[g],
                (((1,), (1,)), ((), ())), preferred_element_type=jnp.float32)


def _resize_kernel(x_ref, k_ref, o_ref):
    """Fused multi-scale bilinear resize: one (N, s^2) @ (s^2, TS) matmul."""
    o_ref[...] = jnp.dot(x_ref[...], k_ref[...],
                         preferred_element_type=jnp.float32).astype(o_ref.dtype)


def _corr_xhat_kernel(*refs, nsc):
    """conv2ds + cosine correlation + interpolate4d + clamp(min=0), one batch element.

    Uses the reordered form  xhat = (k_u s_u)(k_v t_v)^T  (identical to
    k_u (s_u t_v^T) k_v^T), with the three scales processed unpadded.

    refs = (cols_0 .. cols_{nsc-1},  w,  k_0 .. k_{nsc-1},  o)
      cols_u : (2, 1, ss_u^2, C*9) bf16   [0]=src, [1]=trg im2col patches
      w      : (nsc, C*9, c4)      bf16   per-scale conv weights (transposed)
      k_u    : (n_sp, ss_u^2)      bf16   interpolate4d (ss_u,ss_u)->(side,side)
      o      : (1, nsc*n_sp, nsc*n_sp) bf16
    """
    cols = refs[:nsc]
    w_ref = refs[nsc]
    ks = refs[nsc + 1:2 * nsc + 1]
    o_ref = refs[2 * nsc + 1]

    sps, tps = [], []
    for u in range(nsc):
        w_u = w_ref[u]                                             # (C*9, c4)
        s = jnp.dot(cols[u][0, 0], w_u, preferred_element_type=jnp.float32)
        t = jnp.dot(cols[u][1, 0], w_u, preferred_element_type=jnp.float32)
        # cosine normalisation per spatial position (reference eps form)
        s = s / (jnp.sqrt(jnp.sum(s * s, axis=1, keepdims=True)) + 1e-5)
        t = t / (jnp.sqrt(jnp.sum(t * t, axis=1, keepdims=True)) + 1e-5)
        ku = ks[u][...]                                            # (n_sp, ss_u^2)
        sps.append(jnp.dot(ku, s.astype(jnp.bfloat16),
                           preferred_element_type=jnp.float32))    # (n_sp, c4)
        tps.append(jnp.dot(ku, t.astype(jnp.bfloat16),
                           preferred_element_type=jnp.float32))
    sp = jnp.concatenate(sps, axis=0).astype(jnp.bfloat16)         # (nsc*n_sp, c4)
    tp = jnp.concatenate(tps, axis=0).astype(jnp.bfloat16)
    xh = lax.dot_general(sp, tp, (((1,), (1,)), ((), ())),
                         preferred_element_type=jnp.float32)       # (nsc*n_sp, nsc*n_sp)
    o_ref[0] = jnp.maximum(xh, 0.0).astype(o_ref.dtype)


def _sig_max_up2_kernel(x_ref, k2_ref, o_ref, *, nsc, nsp):
    """sigmoid -> max over the (scale, scale) channel grid -> interpolate4d(2x).

    sigmoid is monotone, so it is applied after the max (identical result, 9x less
    EUP work).  Source-scale max uses a sublane-aligned leading-dim reshape.
    """
    y = x_ref[0]                                     # (nsc*nsp, nsc*nsp) f32
    y3 = y.reshape(nsc, nsp, nsc * nsp)              # leading-dim split, no relayout
    m = y3[0]
    for u in range(1, nsc):
        m = jnp.maximum(m, y3[u])                    # (nsp, nsc*nsp)
    mm = m[:, 0:nsp]
    for v in range(1, nsc):
        mm = jnp.maximum(mm, m[:, v * nsp:(v + 1) * nsp])          # (nsp, nsp)
    mm = jax.nn.sigmoid(mm)
    k2 = k2_ref[...]                                 # (4*nsp, nsp) bf16
    t = jnp.dot(k2, mm.astype(jnp.bfloat16), preferred_element_type=jnp.float32)
    up = lax.dot_general(t.astype(jnp.bfloat16), k2, (((1,), (1,)), ((), ())),
                         preferred_element_type=jnp.float32)       # (4nsp, 4nsp)
    o_ref[0] = up.astype(o_ref.dtype)


def _softplus_mutual_kernel(x_ref, o_ref):
    """torch Softplus (beta=1, thr=20) + Correlation.mutual_nn_filter, one element."""
    x = x_ref[0]                                     # (n2, n2) f32
    sp = jnp.maximum(x, 0.0) + jnp.log(1.0 + jnp.exp(-jnp.abs(x)))
    y = jnp.where(x > 20.0, x, sp)
    rmax = jnp.max(y, axis=1, keepdims=True)
    cmax = jnp.max(y, axis=0, keepdims=True)
    # reference replaces exact-zero maxima with 1e-30; softplus output is > 0 so
    # this branch is inert, kept for parity.
    rmax = jnp.where(rmax == 0.0, 1e-30, rmax)
    cmax = jnp.where(cmax == 0.0, 1e-30, cmax)
    o_ref[0] = y * ((y / rmax) * (y / cmax))


# ---------------------------------------------------------------------------
# pallas_call wrappers
# ---------------------------------------------------------------------------
class AXBTOperator:
    """Pre-arranged (A, B) operator pair:  out[n] = bias + sum_g A[g] @ X[n] @ B[g]^T.

    Single "arbitrary" grid axis over g blocks; the whole batch and the f32 output
    stay VMEM-resident across the grid, operands are bf16 with f32 MXU accumulation.
    """

    def __init__(self, A, B, bias=0.0, g_block=None, block_bytes=4 * 1024 * 1024):
        A = np.asarray(A, np.float32)
        B = np.asarray(B, np.float32)
        G, P, M = A.shape
        Gb, Q, K = B.shape
        assert Gb == G
        if g_block is None:
            divs = [d for d in range(1, G + 1) if G % d == 0
                    and d * P * M * 2 <= block_bytes and d * Q * K * 2 <= block_bytes]
            g_block = max(divs) if divs else 1
        assert G % g_block == 0
        self.G, self.P, self.M, self.Q, self.K = G, P, M, Q, K
        self.g_block = g_block
        self.bias = float(bias)
        self.A = jnp.asarray(A, dtype=jnp.bfloat16)      # 0/1 shifts -> exact in bf16
        self.B = jnp.asarray(B, dtype=jnp.bfloat16)

    def __call__(self, X):
        nb = X.shape[0]
        Xb = X.astype(jnp.bfloat16)
        g_blk = self.g_block
        P, M, Q, K = self.P, self.M, self.Q, self.K
        kern = functools.partial(_sum_axbt_kernel, nb=nb, g_blk=g_blk, bias=self.bias)
        return pl.pallas_call(
            kern,
            out_shape=jax.ShapeDtypeStruct((nb, P, Q), jnp.float32),
            grid_spec=pltpu.PrefetchScalarGridSpec(
                num_scalar_prefetch=0,
                grid=(self.G // g_blk,),
                in_specs=[
                    pl.BlockSpec((g_blk, P, M), lambda g: (g, 0, 0)),
                    pl.BlockSpec((nb, M, K), lambda g: (0, 0, 0)),
                    pl.BlockSpec((g_blk, Q, K), lambda g: (g, 0, 0)),
                ],
                out_specs=pl.BlockSpec((nb, P, Q), lambda g: (0, 0, 0)),
            ),
            compiler_params=pltpu.CompilerParams(
                dimension_semantics=("arbitrary",),
                vmem_limit_bytes=32 * 1024 * 1024),     # > v5e's 16 MiB scoped default
        )(self.A, Xb, self.B)


def resize_all(x_flat, kron_T):
    n = x_flat.shape[0]
    ts = kron_T.shape[1]
    return pl.pallas_call(
        _resize_kernel,
        out_shape=jax.ShapeDtypeStruct((n, ts), jnp.bfloat16),
        grid_spec=pltpu.PrefetchScalarGridSpec(
            num_scalar_prefetch=0,
            grid=(1,),
            in_specs=[pl.BlockSpec(x_flat.shape, lambda i: (0, 0)),
                      pl.BlockSpec(kron_T.shape, lambda i: (0, 0))],
            out_specs=pl.BlockSpec((n, ts), lambda i: (0, 0))),
        compiler_params=pltpu.CompilerParams(dimension_semantics=("arbitrary",)),
    )(x_flat, kron_T)


def corr_to_xhat(cols_list, w_all, k_list, bsz, n_out):
    nsc = len(cols_list)
    in_specs, inputs = [], []
    for c in cols_list:
        shp = c.shape                                    # (2, bsz, ss^2, C*9)
        in_specs.append(pl.BlockSpec((2, 1, shp[2], shp[3]),
                                     lambda n: (0, n, 0, 0)))
        inputs.append(c)
    in_specs.append(pl.BlockSpec(w_all.shape, lambda n: (0, 0, 0)))
    inputs.append(w_all)
    for k in k_list:
        in_specs.append(pl.BlockSpec(k.shape, lambda n: (0, 0)))
        inputs.append(k)
    return pl.pallas_call(
        functools.partial(_corr_xhat_kernel, nsc=nsc),
        out_shape=jax.ShapeDtypeStruct((bsz, n_out, n_out), jnp.bfloat16),
        grid_spec=pltpu.PrefetchScalarGridSpec(
            num_scalar_prefetch=0,
            grid=(bsz,),
            in_specs=in_specs,
            out_specs=pl.BlockSpec((1, n_out, n_out), lambda n: (n, 0, 0))),
        compiler_params=pltpu.CompilerParams(dimension_semantics=("parallel",)),
    )(*inputs)


def sigmoid_max_up2(out6, kron_up2, nsc, nsp):
    bsz, n6, _ = out6.shape
    n4 = kron_up2.shape[0]
    return pl.pallas_call(
        functools.partial(_sig_max_up2_kernel, nsc=nsc, nsp=nsp),
        out_shape=jax.ShapeDtypeStruct((bsz, n4, n4), jnp.bfloat16),
        grid_spec=pltpu.PrefetchScalarGridSpec(
            num_scalar_prefetch=0,
            grid=(bsz,),
            in_specs=[pl.BlockSpec((1, n6, n6), lambda n: (n, 0, 0)),
                      pl.BlockSpec(kron_up2.shape, lambda n: (0, 0))],
            out_specs=pl.BlockSpec((1, n4, n4), lambda n: (n, 0, 0))),
        compiler_params=pltpu.CompilerParams(dimension_semantics=("parallel",)),
    )(out6, kron_up2)


def softplus_mutual(x):
    bsz, n2, _ = x.shape
    return pl.pallas_call(
        _softplus_mutual_kernel,
        out_shape=jax.ShapeDtypeStruct((bsz, n2, n2), jnp.float32),
        grid_spec=pltpu.PrefetchScalarGridSpec(
            num_scalar_prefetch=0,
            grid=(bsz,),
            in_specs=[pl.BlockSpec((1, n2, n2), lambda n: (n, 0, 0))],
            out_specs=pl.BlockSpec((1, n2, n2), lambda n: (n, 0, 0))),
        compiler_params=pltpu.CompilerParams(dimension_semantics=("parallel",)),
    )(x)


# ---------------------------------------------------------------------------
# Deterministic parameter setup and operator-matrix construction (numpy, init-time)
# ---------------------------------------------------------------------------
def bilinear_matrix(out_size, in_size):
    """1-D weights of F.interpolate(mode='bilinear', align_corners=True)."""
    m = np.zeros((out_size, in_size), dtype=np.float32)
    if out_size == 1:
        m[0, 0] = 1.0
        return m
    for i in range(out_size):
        x = i * (in_size - 1) / (out_size - 1)
        x0 = min(max(int(math.floor(x)), 0), in_size - 1)
        x1 = min(x0 + 1, in_size - 1)
        w1 = x - x0
        m[i, x0] += 1.0 - w1
        m[i, x1] += w1
    return m


def shift_matrix(n, d):
    """S[i, i'] = 1  iff  i' = i + d  (zero padding at the borders)."""
    return np.eye(n, n, k=d, dtype=np.float32)


def conv4d_operator_stacks(kernel4d, n):
    """'same'-padded 4-D cross-correlation (fast4d) as sum_m A_m X B_m^T."""
    ksz = kernel4d.shape[0]
    psz = ksz // 2
    sh = [shift_matrix(n, d - psz) for d in range(ksz)]
    sk = np.stack([np.stack([np.kron(sh[a], sh[b]) for b in range(ksz)])
                   for a in range(ksz)])                      # (k,k,n^2,n^2)
    A = sk.reshape(ksz * ksz, n * n, n * n)
    B = np.einsum('abcd,cdmn->abmn', kernel4d, sk).reshape(ksz * ksz, n * n, n * n)
    return A.astype(np.float32), B.astype(np.float32)


def conv6d_operator_stacks(kernel6d, n_sc, n_sp):
    """'same'-padded 6-D cross-correlation (fast6d) on the flattened
    (scale, y, x) x (scale, k, l) representation as sum_g A_g X B_g^T.

    A_g has no dependence on the target-scale tap v, so B is pre-summed over v,
    shrinking G from ks_sc^2*ks_sp^2 (225) to ks_sc*ks_sp^2 (75).
    """
    ks_sc, ks_sp = kernel6d.shape[0], kernel6d.shape[2]
    p_sc, p_sp = ks_sc // 2, ks_sp // 2
    ssc = [shift_matrix(n_sc, d - p_sc) for d in range(ks_sc)]
    ssp = [shift_matrix(n_sp, d - p_sp) for d in range(ks_sp)]
    sk = np.stack([np.stack([np.kron(ssp[a], ssp[b]) for b in range(ks_sp)])
                   for a in range(ks_sp)])                    # (5,5,n_sp^2,n_sp^2)
    r = np.einsum('uvabcd,cdmn->uvabmn', kernel6d, sk)        # (3,3,5,5,n_sp^2,n_sp^2)
    a_list, b_list = [], []
    for u in range(ks_sc):
        for a in range(ks_sp):
            for b in range(ks_sp):
                a_list.append(np.kron(ssc[u], sk[a, b]))
                b_list.append(sum(np.kron(ssc[v], r[u, v, a, b])
                                  for v in range(ks_sc)))
    return (np.stack(a_list).astype(np.float32),
            np.stack(b_list).astype(np.float32))


def im2col3x3(x):
    """NCHW, 3x3 window, padding 1 -> (N, H*W, C*9), column order (c, ky, kx)."""
    n, c, h, w = x.shape
    xp = jnp.pad(x, ((0, 0), (0, 0), (1, 1), (1, 1)))
    patches = jnp.stack([xp[:, :, ky:ky + h, kx:kx + w]
                         for ky in range(3) for kx in range(3)], axis=2)  # (N,C,9,H,W)
    return patches.transpose(0, 3, 4, 1, 2).reshape(n, h * w, c * 9)


# ---------------------------------------------------------------------------
# CHMLearner
# ---------------------------------------------------------------------------
class CHMLearnerPallas:
    def __init__(self, ktype, feat_dim, side, key):
        self.scales = [0.5, 1, 2]
        self.ktype = ktype            # see TODO(synk) at top of file
        self.feat_dim = feat_dim
        self.side = side
        self.nsc = len(self.scales)
        self.n_sp = side * side
        c4 = feat_dim // 4
        self.c4 = c4
        ks_tr, ks_sc = 5, 3

        keys = jax.random.split(key, 8)
        # nn.Conv2d(feat_dim, feat_dim//4, 3, padding=1, bias=False) x 3
        conv_w = [np.asarray(jax.random.normal(keys[i], (c4, feat_dim, 3, 3),
                                               jnp.float32))
                  * (1.0 / math.sqrt(feat_dim * 9)) for i in range(3)]
        w_all = np.stack([w.reshape(c4, feat_dim * 9).T for w in conv_w])  # (3,C*9,c4)
        self.w_all = jnp.asarray(w_all, dtype=jnp.bfloat16)

        # CHM6d(1,1,ksz_scale=3, ksz_translation=5) kernel + bias
        k6 = np.asarray(jax.random.normal(
            keys[3], (ks_sc, ks_sc, ks_tr, ks_tr, ks_tr, ks_tr), jnp.float32)) * 0.02
        bias6 = float(np.asarray(jax.random.normal(keys[4], ())) * 0.01)
        # CHM4d(1,1,ksz_translation=5, bias=True) kernel + bias
        k4 = np.asarray(jax.random.normal(keys[5], (ks_tr,) * 4, jnp.float32)) * 0.02
        bias4 = float(np.asarray(jax.random.normal(keys[6], ())) * 0.01)

        # multi-scale sides: round(side * sqrt(scale))
        self.ssides = [round(side * math.sqrt(s)) for s in self.scales]
        self.TS = sum(ss * ss for ss in self.ssides)

        # fused bilinear resize (all scales in one matmul): x_flat @ kron_resize_T
        kron_rows = [np.kron(bilinear_matrix(ss, side), bilinear_matrix(ss, side))
                     for ss in self.ssides]                    # (ss^2, side^2)
        self.kron_resize_T = jnp.asarray(np.concatenate(kron_rows, axis=0).T,
                                         dtype=jnp.bfloat16)   # (side^2, TS)

        # per-scale interpolate4d (ss,ss)->(side,side) operators: (n_sp, ss^2)
        self.k_to_side = [
            jnp.asarray(np.kron(bilinear_matrix(side, ss), bilinear_matrix(side, ss)),
                        dtype=jnp.bfloat16)
            for ss in self.ssides]

        # interpolate4d(side,side)->(2side,2side)
        l2 = bilinear_matrix(2 * side, side)
        self.kron_up2 = jnp.asarray(np.kron(l2, l2), dtype=jnp.bfloat16)  # (4n, n)

        # CHM6d / CHM4d 'same' cross-correlations as  bias + sum_g A_g X B_g^T
        A6, B6 = conv6d_operator_stacks(k6, n_sc=self.nsc, n_sp=side)
        self.op6 = AXBTOperator(A6, B6, bias=bias6)
        A4, B4 = conv4d_operator_stacks(k4, n=2 * side)
        self.op4 = AXBTOperator(A4, B4, bias=bias4)

    # -- forward --------------------------------------------------------------
    def __call__(self, src_feat, trg_feat):
        bsz, C, side, _ = src_feat.shape
        n_sp = self.n_sp

        # ---- fused multi-scale bilinear resize of src & trg features --------
        x_all = jnp.concatenate([src_feat, trg_feat], axis=0)      # (2b, C, s, s)
        x_flat = x_all.reshape(2 * bsz * C, side * side).astype(jnp.bfloat16)
        res = resize_all(x_flat, self.kron_resize_T)               # (2b*C, TS) bf16
        res = res.reshape(2 * bsz, C, self.TS)

        # ---- per-scale im2col (unpadded) -------------------------------------
        cols_list = []
        off = 0
        for ss in self.ssides:
            seg = res[:, :, off:off + ss * ss].reshape(2 * bsz, C, ss, ss)
            cols = im2col3x3(seg).reshape(2, bsz, ss * ss, C * 9)   # src / trg split
            cols_list.append(cols)
            off += ss * ss

        # ---- conv2ds + cosine correlation + interpolate4d + clamp(min=0) ----
        xhat = corr_to_xhat(cols_list, self.w_all, self.k_to_side, bsz,
                            self.nsc * n_sp)                        # (b, 3n, 3n) bf16

        # ---- CHM6d: 6-D 'same' convolution, kernel (3,3,5,5,5,5) + bias ------
        out6 = self.op6(xhat)                                       # (b, 3n, 3n) f32

        # ---- sigmoid, max over the 9 (scale, scale) channels, interp to 2x ---
        corr4 = sigmoid_max_up2(out6, self.kron_up2, self.nsc, n_sp)  # (b, 4n, 4n)

        # ---- CHM4d: 4-D 'same' convolution, kernel (5,5,5,5) + bias ----------
        out4 = self.op4(corr4)                                      # (b, 4n, 4n) f32

        # ---- softplus + mutual nearest-neighbour filtering -------------------
        return softplus_mutual(out4)                                # (b, (2h*2w)^2)


# ---------------------------------------------------------------------------
if __name__ == "__main__":
    key = jax.random.PRNGKey(0)
    k1, k2, k3, k4 = jax.random.split(key, 4)

    # quick correctness spot-check of the core blocked reduction kernel
    A_t = jax.random.normal(k4, (4, 32, 24), jnp.float32)
    X_t = jax.random.normal(k1, (2, 24, 40), jnp.float32)
    B_t = jax.random.normal(k2, (4, 32, 40), jnp.float32)
    got = AXBTOperator(np.asarray(A_t), np.asarray(B_t))(X_t)
    ref = jnp.einsum('gpm,bmk,gqk->bpq',
                     A_t.astype(jnp.bfloat16).astype(jnp.float32),
                     X_t.astype(jnp.bfloat16).astype(jnp.float32),
                     B_t.astype(jnp.bfloat16).astype(jnp.float32))
    rel_err = float(jnp.max(jnp.abs(got - ref)) / (jnp.max(jnp.abs(ref)) + 1e-6))
    assert rel_err < 2e-2, rel_err

    bsz, feat_dim, side = 2, 16, 8
    src_feat = jax.random.normal(k1, (bsz, feat_dim, side, side), jnp.float32)
    trg_feat = jax.random.normal(k2, (bsz, feat_dim, side, side), jnp.float32)

    model = CHMLearnerPallas(ktype="psi", feat_dim=feat_dim, side=side, key=k3)
    out = model(src_feat, trg_feat)
    out = jax.block_until_ready(out)

    assert out.shape == (bsz, (2 * side) ** 2, (2 * side) ** 2)
    assert bool(jnp.all(jnp.isfinite(out)))
    print("KERNEL_OK")
</pallas_src>

<mosaic_0001>
module attributes {stable_mosaic.version = 11 : i64} {
  func.func @_sum_axbt_kernel(%arg0: i32, %arg1: memref<4x32x24xbf16, #tpu.memory_space<vmem>>, %arg2: memref<2x24x40xbf16, #tpu.memory_space<vmem>>, %arg3: memref<4x32x40xbf16, #tpu.memory_space<vmem>>, %arg4: memref<2x32x32xf32, #tpu.memory_space<vmem>>) attributes {dimension_semantics = [#tpu.dimension_semantics<arbitrary>], iteration_bounds = array<i64: 1>, scalar_prefetch = 0 : i64, scratch_operands = 0 : i64, tpu.core_type = #tpu.core_type<tc>, window_params = [{transform_indices = @transform_0, window_bounds = array<i64: 4, 32, 24>}, {pipeline_mode = #tpu.pipeline_mode<synchronous>, transform_indices = @transform_1, window_bounds = array<i64: 2, 24, 40>}, {transform_indices = @transform_2, window_bounds = array<i64: 4, 32, 40>}, {pipeline_mode = #tpu.pipeline_mode<synchronous>, transform_indices = @transform_3, window_bounds = array<i64: 2, 32, 32>}]} {
    %c0_i32 = arith.constant 0 : i32
    %0 = arith.cmpi eq, %arg0, %c0_i32 : i32
    %1 = arith.extui %0 : i1 to i32
    %c0_i32_0 = arith.constant 0 : i32
    %2 = arith.cmpi ne, %1, %c0_i32_0 : i32
    scf.if %2 {
      %cst_114 = arith.constant 0.000000e+00 : f32
      %111 = vector.broadcast %cst_114 : f32 to vector<2x32x32xf32>
      %c0_115 = arith.constant 0 : index
      %c0_116 = arith.constant 0 : index
      %c0_117 = arith.constant 0 : index
      %112 = vector.load %arg4[%c0_115, %c0_116, %c0_117] : memref<2x32x32xf32, #tpu.memory_space<vmem>>, vector<2x32x32xf32>
      tpu.vector_store %arg4[%c0_115, %c0_116, %c0_117], %111 {strides = array<i32>} : memref<2x32x32xf32, #tpu.memory_space<vmem>>, vector<2x32x32xf32>,
    } else {
    }
    %c0 = arith.constant 0 : index
    %c0_1 = arith.constant 0 : index
    %c0_2 = arith.constant 0 : index
    %3 = vector.load %arg2[%c0, %c0_1, %c0_2] : memref<2x24x40xbf16, #tpu.memory_space<vmem>>, vector<1x24x40xbf16>
    %4 = vector.shape_cast %3 : vector<1x24x40xbf16> to vector<24x40xbf16>
    %c0_3 = arith.constant 0 : index
    %c0_4 = arith.constant 0 : index
    %c0_5 = arith.constant 0 : index
    %5 = vector.load %arg1[%c0_3, %c0_4, %c0_5] : memref<4x32x24xbf16, #tpu.memory_space<vmem>>, vector<1x32x24xbf16>
    %6 = vector.shape_cast %5 : vector<1x32x24xbf16> to vector<32x24xbf16>
    %cst = arith.constant dense<0.000000e+00> : vector<32x40xf32>
    %7 = tpu.matmul %6, %4, %cst {dimension_numbers = #tpu.dot_dimension_numbers<[1], [0], [0], [1], [0, 0, 1, 1], [], []>} : vector<32x24xbf16>, vector<24x40xbf16>, vector<32x40xf32> -> vector<32x40xf32>
    %c0_6 = arith.constant 0 : index
    %c0_7 = arith.constant 0 : index
    %c0_8 = arith.constant 0 : index
    %8 = vector.load %arg4[%c0_6, %c0_7, %c0_8] : memref<2x32x32xf32, #tpu.memory_space<vmem>>, vector<1x32x32xf32>
    %9 = vector.shape_cast %8 : vector<1x32x32xf32> to vector<32x32xf32>
    %10 = arith.truncf %7 : vector<32x40xf32> to vector<32x40xbf16>
    %c0_9 = arith.constant 0 : index
    %c0_10 = arith.constant 0 : index
    %c0_11 = arith.constant 0 : index
    %11 = vector.load %arg3[%c0_9, %c0_10, %c0_11] : memref<4x32x40xbf16, #tpu.memory_space<vmem>>, vector<1x32x40xbf16>
    %12 = vector.shape_cast %11 : vector<1x32x40xbf16> to vector<32x40xbf16>
    %cst_12 = arith.constant dense<0.000000e+00> : vector<32x32xf32>
    %13 = tpu.matmul %10, %12, %cst_12 {dimension_numbers = #tpu.dot_dimension_numbers<[1], [1], [0], [0], [0, 0, 1, 0], [], []>} : vector<32x40xbf16>, vector<32x40xbf16>, vector<32x32xf32> -> vector<32x32xf32>
    %14 = arith.addf %9, %13 : vector<32x32xf32>
    %c0_13 = arith.constant 0 : index
    %c0_14 = arith.constant 0 : index
    %c0_15 = arith.constant 0 : index
    %15 = vector.load %arg4[%c0_13, %c0_14, %c0_15] : memref<2x32x32xf32, #tpu.memory_space<vmem>>, vector<1x32x32xf32>
    %16 = vector.shape_cast %15 : vector<1x32x32xf32> to vector<32x32xf32>
    %17 = vector.shape_cast %14 : vector<32x32xf32> to vector<1x32x32xf32>
    tpu.vector_store %arg4[%c0_13, %c0_14, %c0_15], %17 {strides = array<i32>} : memref<2x32x32xf32, #tpu.memory_space<vmem>>, vector<1x32x32xf32>,
    %c1 = arith.constant 1 : index
    %c0_16 = arith.constant 0 : index
    %c0_17 = arith.constant 0 : index
    %18 = vector.load %arg1[%c1, %c0_16, %c0_17] : memref<4x32x24xbf16, #tpu.memory_space<vmem>>, vector<1x32x24xbf16>
    %19 = vector.shape_cast %18 : vector<1x32x24xbf16> to vector<32x24xbf16>
    %cst_18 = arith.constant dense<0.000000e+00> : vector<32x40xf32>
    %20 = tpu.matmul %19, %4, %cst_18 {dimension_numbers = #tpu.dot_dimension_numbers<[1], [0], [0], [1], [0, 0, 1, 1], [], []>} : vector<32x24xbf16>, vector<24x40xbf16>, vector<32x40xf32> -> vector<32x40xf32>
    %c0_19 = arith.constant 0 : index
    %c0_20 = arith.constant 0 : index
    %c0_21 = arith.constant 0 : index
    %21 = vector.load %arg4[%c0_19, %c0_20, %c0_21] : memref<2x32x32xf32, #tpu.memory_space<vmem>>, vector<1x32x32xf32>
    %22 = vector.shape_cast %21 : vector<1x32x32xf32> to vector<32x32xf32>
    %23 = arith.truncf %20 : vector<32x40xf32> to vector<32x40xbf16>
    %c1_22 = arith.constant 1 : index
    %c0_23 = arith.constant 0 : index
    %c0_24 = arith.constant 0 : index
    %24 = vector.load %arg3[%c1_22, %c0_23, %c0_24] : memref<4x32x40xbf16, #tpu.memory_space<vmem>>, vector<1x32x40xbf16>
    %25 = vector.shape_cast %24 : vector<1x32x40xbf16> to vector<32x40xbf16>
    %cst_25 = arith.constant dense<0.000000e+00> : vector<32x32xf32>
    %26 = tpu.matmul %23, %25, %cst_25 {dimension_numbers = #tpu.dot_dimension_numbers<[1], [1], [0], [0], [0, 0, 1, 0], [], []>} : vector<32x40xbf16>, vector<32x40xbf16>, vector<32x32xf32> -> vector<32x32xf32>
    %27 = arith.addf %22, %26 : vector<32x32xf32>
    %c0_26 = arith.constant 0 : index
    %c0_27 = arith.constant 0 : index
    %c0_28 = arith.constant 0 : index
    %28 = vector.load %arg4[%c0_26, %c0_27, %c0_28] : memref<2x32x32xf32, #tpu.memory_space<vmem>>, vector<1x32x32xf32>
    %29 = vector.shape_cast %28 : vector<1x32x32xf32> to vector<32x32xf32>
    %30 = vector.shape_cast %27 : vector<32x32xf32> to vector<1x32x32xf32>
    tpu.vector_store %arg4[%c0_26, %c0_27, %c0_28], %30 {strides = array<i32>} : memref<2x32x32xf32, #tpu.memory_space<vmem>>, vector<1x32x32xf32>,
    %c2 = arith.constant 2 : index
    %c0_29 = arith.constant 0 : index
    %c0_30 = arith.constant 0 : index
    %31 = vector.load %arg1[%c2, %c0_29, %c0_30] : memref<4x32x24xbf16, #tpu.memory_space<vmem>>, vector<1x32x24xbf16>
    %32 = vector.shape_cast %31 : vector<1x32x24xbf16> to vector<32x24xbf16>
    %cst_31 = arith.constant dense<0.000000e+00> : vector<32x40xf32>
    %33 = tpu.matmul %32, %4, %cst_31 {dimension_numbers = #tpu.dot_dimension_numbers<[1], [0], [0], [1], [0, 0, 1, 1], [], []>} : vector<32x24xbf16>, vector<24x40xbf16>, vector<32x40xf32> -> vector<32x40xf32>
    %c0_32 = arith.constant 0 : index
    %c0_33 = arith.constant 0 : index
    %c0_34 = arith.constant 0 : index
    %34 = vector.load %arg4[%c0_32, %c0_33, %c0_34] : memref<2x32x32xf32, #tpu.memory_space<vmem>>, vector<1x32x32xf32>
    %35 = vector.shape_cast %34 : vector<1x32x32xf32> to vector<32x32xf32>
    %36 = arith.truncf %33 : vector<32x40xf32> to vector<32x40xbf16>
    %c2_35 = arith.constant 2 : index
    %c0_36 = arith.constant 0 : index
    %c0_37 = arith.constant 0 : index
    %37 = vector.load %arg3[%c2_35, %c0_36, %c0_37] : memref<4x32x40xbf16, #tpu.memory_space<vmem>>, vector<1x32x40xbf16>
    %38 = vector.shape_cast %37 : vector<1x32x40xbf16> to vector<32x40xbf16>
    %cst_38 = arith.constant dense<0.000000e+00> : vector<32x32xf32>
    %39 = tpu.matmul %36, %38, %cst_38 {dimension_numbers = #tpu.dot_dimension_numbers<[1], [1], [0], [0], [0, 0, 1, 0], [], []>} : vector<32x40xbf16>, vector<32x40xbf16>, vector<32x32xf32> -> vector<32x32xf32>
    %40 = arith.addf %35, %39 : vector<32x32xf32>
    %c0_39 = arith.constant 0 : index
    %c0_40 = arith.constant 0 : index
    %c0_41 = arith.constant 0 : index
    %41 = vector.load %arg4[%c0_39, %c0_40, %c0_41] : memref<2x32x32xf32, #tpu.memory_space<vmem>>, vector<1x32x32xf32>
    %42 = vector.shape_cast %41 : vector<1x32x32xf32> to vector<32x32xf32>
    %43 = vector.shape_cast %40 : vector<32x32xf32> to vector<1x32x32xf32>
    tpu.vector_store %arg4[%c0_39, %c0_40, %c0_41], %43 {strides = array<i32>} : memref<2x32x32xf32, #tpu.memory_space<vmem>>, vector<1x32x32xf32>,
    %c3 = arith.constant 3 : index
    %c0_42 = arith.constant 0 : index
    %c0_43 = arith.constant 0 : index
    %44 = vector.load %arg1[%c3, %c0_42, %c0_43] : memref<4x32x24xbf16, #tpu.memory_space<vmem>>, vector<1x32x24xbf16>
    %45 = vector.shape_cast %44 : vector<1x32x24xbf16> to vector<32x24xbf16>
    %cst_44 = arith.constant dense<0.000000e+00> : vector<32x40xf32>
    %46 = tpu.matmul %45, %4, %cst_44 {dimension_numbers = #tpu.dot_dimension_numbers<[1], [0], [0], [1], [0, 0, 1, 1], [], []>} : vector<32x24xbf16>, vector<24x40xbf16>, vector<32x40xf32> -> vector<32x40xf32>
    %c0_45 = arith.constant 0 : index
    %c0_46 = arith.constant 0 : index
    %c0_47 = arith.constant 0 : index
    %47 = vector.load %arg4[%c0_45, %c0_46, %c0_47] : memref<2x32x32xf32, #tpu.memory_space<vmem>>, vector<1x32x32xf32>
    %48 = vector.shape_cast %47 : vector<1x32x32xf32> to vector<32x32xf32>
    %49 = arith.truncf %46 : vector<32x40xf32> to vector<32x40xbf16>
    %c3_48 = arith.constant 3 : index
    %c0_49 = arith.constant 0 : index
    %c0_50 = arith.constant 0 : index
    %50 = vector.load %arg3[%c3_48, %c0_49, %c0_50] : memref<4x32x40xbf16, #tpu.memory_space<vmem>>, vector<1x32x40xbf16>
    %51 = vector.shape_cast %50 : vector<1x32x40xbf16> to vector<32x40xbf16>
    %cst_51 = arith.constant dense<0.000000e+00> : vector<32x32xf32>
    %52 = tpu.matmul %49, %51, %cst_51 {dimension_numbers = #tpu.dot_dimension_numbers<[1], [1], [0], [0], [0, 0, 1, 0], [], []>} : vector<32x40xbf16>, vector<32x40xbf16>, vector<32x32xf32> -> vector<32x32xf32>
    %53 = arith.addf %48, %52 : vector<32x32xf32>
    %c0_52 = arith.constant 0 : index
    %c0_53 = arith.constant 0 : index
    %c0_54 = arith.constant 0 : index
    %54 = vector.load %arg4[%c0_52, %c0_53, %c0_54] : memref<2x32x32xf32, #tpu.memory_space<vmem>>, vector<1x32x32xf32>
    %55 = vector.shape_cast %54 : vector<1x32x32xf32> to vector<32x32xf32>
    %56 = vector.shape_cast %53 : vector<32x32xf32> to vector<1x32x32xf32>
    tpu.vector_store %arg4[%c0_52, %c0_53, %c0_54], %56 {strides = array<i32>} : memref<2x32x32xf32, #tpu.memory_space<vmem>>, vector<1x32x32xf32>,
    %c1_55 = arith.constant 1 : index
    %c0_56 = arith.constant 0 : index
    %c0_57 = arith.constant 0 : index
    %57 = vector.load %arg2[%c1_55, %c0_56, %c0_57] : memref<2x24x40xbf16, #tpu.memory_space<vmem>>, vector<1x24x40xbf16>
    %58 = vector.shape_cast %57 : vector<1x24x40xbf16> to vector<24x40xbf16>
    %c0_58 = arith.constant 0 : index
    %c0_59 = arith.constant 0 : index
    %c0_60 = arith.constant 0 : index
    %59 = vector.load %arg1[%c0_58, %c0_59, %c0_60] : memref<4x32x24xbf16, #tpu.memory_space<vmem>>, vector<1x32x24xbf16>
    %60 = vector.shape_cast %59 : vector<1x32x24xbf16> to vector<32x24xbf16>
    %cst_61 = arith.constant dense<0.000000e+00> : vector<32x40xf32>
    %61 = tpu.matmul %60, %58, %cst_61 {dimension_numbers = #tpu.dot_dimension_numbers<[1], [0], [0], [1], [0, 0, 1, 1], [], []>} : vector<32x24xbf16>, vector<24x40xbf16>, vector<32x40xf32> -> vector<32x40xf32>
    %c1_62 = arith.constant 1 : index
    %c0_63 = arith.constant 0 : index
    %c0_64 = arith.constant 0 : index
    %62 = vector.load %arg4[%c1_62, %c0_63, %c0_64] : memref<2x32x32xf32, #tpu.memory_space<vmem>>, vector<1x32x32xf32>
    %63 = vector.shape_cast %62 : vector<1x32x32xf32> to vector<32x32xf32>
    %64 = arith.truncf %61 : vector<32x40xf32> to vector<32x40xbf16>
    %c0_65 = arith.constant 0 : index
    %c0_66 = arith.constant 0 : index
    %c0_67 = arith.constant 0 : index
    %65 = vector.load %arg3[%c0_65, %c0_66, %c0_67] : memref<4x32x40xbf16, #tpu.memory_space<vmem>>, vector<1x32x40xbf16>
    %66 = vector.shape_cast %65 : vector<1x32x40xbf16> to vector<32x40xbf16>
    %cst_68 = arith.constant dense<0.000000e+00> : vector<32x32xf32>
    %67 = tpu.matmul %64, %66, %cst_68 {dimension_numbers = #tpu.dot_dimension_numbers<[1], [1], [0], [0], [0, 0, 1, 0], [], []>} : vector<32x40xbf16>, vector<32x40xbf16>, vector<32x32xf32> -> vector<32x32xf32>
    %68 = arith.addf %63, %67 : vector<32x32xf32>
    %c1_69 = arith.constant 1 : index
    %c0_70 = arith.constant 0 : index
    %c0_71 = arith.constant 0 : index
    %69 = vector.load %arg4[%c1_69, %c0_70, %c0_71] : memref<2x32x32xf32, #tpu.memory_space<vmem>>, vector<1x32x32xf32>
    %70 = vector.shape_cast %69 : vector<1x32x32xf32> to vector<32x32xf32>
    %71 = vector.shape_cast %68 : vector<32x32xf32> to vector<1x32x32xf32>
    tpu.vector_store %arg4[%c1_69, %c0_70, %c0_71], %71 {strides = array<i32>} : memref<2x32x32xf32, #tpu.memory_space<vmem>>, vector<1x32x32xf32>,
    %c1_72 = arith.constant 1 : index
    %c0_73 = arith.constant 0 : index
    %c0_74 = arith.constant 0 : index
    %72 = vector.load %arg1[%c1_72, %c0_73, %c0_74] : memref<4x32x24xbf16, #tpu.memory_space<vmem>>, vector<1x32x24xbf16>
    %73 = vector.shape_cast %72 : vector<1x32x24xbf16> to vector<32x24xbf16>
    %cst_75 = arith.constant dense<0.000000e+00> : vector<32x40xf32>
    %74 = tpu.matmul %73, %58, %cst_75 {dimension_numbers = #tpu.dot_dimension_numbers<[1], [0], [0], [1], [0, 0, 1, 1], [], []>} : vector<32x24xbf16>, vector<24x40xbf16>, vector<32x40xf32> -> vector<32x40xf32>
    %c1_76 = arith.constant 1 : index
    %c0_77 = arith.constant 0 : index
    %c0_78 = arith.constant 0 : index
    %75 = vector.load %arg4[%c1_76, %c0_77, %c0_78] : memref<2x32x32xf32, #tpu.memory_space<vmem>>, vector<1x32x32xf32>
    %76 = vector.shape_cast %75 : vector<1x32x32xf32> to vector<32x32xf32>
    %77 = arith.truncf %74 : vector<32x40xf32> to vector<32x40xbf16>
    %c1_79 = arith.constant 1 : index
    %c0_80 = arith.constant 0 : index
    %c0_81 = arith.constant 0 : index
    %78 = vector.load %arg3[%c1_79, %c0_80, %c0_81] : memref<4x32x40xbf16, #tpu.memory_space<vmem>>, vector<1x32x40xbf16>
    %79 = vector.shape_cast %78 : vector<1x32x40xbf16> to vector<32x40xbf16>
    %cst_82 = arith.constant dense<0.000000e+00> : vector<32x32xf32>
    %80 = tpu.matmul %77, %79, %cst_82 {dimension_numbers = #tpu.dot_dimension_numbers<[1], [1], [0], [0], [0, 0, 1, 0], [], []>} : vector<32x40xbf16>, vector<32x40xbf16>, vector<32x32xf32> -> vector<32x32xf32>
    %81 = arith.addf %76, %80 : vector<32x32xf32>
    %c1_83 = arith.constant 1 : index
    %c0_84 = arith.constant 0 : index
    %c0_85 = arith.constant 0 : index
    %82 = vector.load %arg4[%c1_83, %c0_84, %c0_85] : memref<2x32x32xf32, #tpu.memory_space<vmem>>, vector<1x32x32xf32>
    %83 = vector.shape_cast %82 : vector<1x32x32xf32> to vector<32x32xf32>
    %84 = vector.shape_cast %81 : vector<32x32xf32> to vector<1x32x32xf32>
    tpu.vector_store %arg4[%c1_83, %c0_84, %c0_85], %84 {strides = array<i32>} : memref<2x32x32xf32, #tpu.memory_space<vmem>>, vector<1x32x32xf32>,
    %c2_86 = arith.constant 2 : index
    %c0_87 = arith.constant 0 : index
    %c0_88 = arith.constant 0 : index
    %85 = vector.load %arg1[%c2_86, %c0_87, %c0_88] : memref<4x32x24xbf16, #tpu.memory_space<vmem>>, vector<1x32x24xbf16>
    %86 = vector.shape_cast %85 : vector<1x32x24xbf16> to vector<32x24xbf16>
    %cst_89 = arith.constant dense<0.000000e+00> : vector<32x40xf32>
    %87 = tpu.matmul %86, %58, %cst_89 {dimension_numbers = #tpu.dot_dimension_numbers<[1], [0], [0], [1], [0, 0, 1, 1], [], []>} : vector<32x24xbf16>, vector<24x40xbf16>, vector<32x40xf32> -> vector<32x40xf32>
    %c1_90 = arith.constant 1 : index
    %c0_91 = arith.constant 0 : index
    %c0_92 = arith.constant 0 : index
    %88 = vector.load %arg4[%c1_90, %c0_91, %c0_92] : memref<2x32x32xf32, #tpu.memory_space<vmem>>, vector<1x32x32xf32>
    %89 = vector.shape_cast %88 : vector<1x32x32xf32> to vector<32x32xf32>
    %90 = arith.truncf %87 : vector<32x40xf32> to vector<32x40xbf16>
    %c2_93 = arith.constant 2 : index
    %c0_94 = arith.constant 0 : index
    %c0_95 = arith.constant 0 : index
    %91 = vector.load %arg3[%c2_93, %c0_94, %c0_95] : memref<4x32x40xbf16, #tpu.memory_space<vmem>>, vector<1x32x40xbf16>
    %92 = vector.shape_cast %91 : vector<1x32x40xbf16> to vector<32x40xbf16>
    %cst_96 = arith.constant dense<0.000000e+00> : vector<32x32xf32>
    %93 = tpu.matmul %90, %92, %cst_96 {dimension_numbers = #tpu.dot_dimension_numbers<[1], [1], [0], [0], [0, 0, 1, 0], [], []>} : vector<32x40xbf16>, vector<32x40xbf16>, vector<32x32xf32> -> vector<32x32xf32>
    %94 = arith.addf %89, %93 : vector<32x32xf32>
    %c1_97 = arith.constant 1 : index
    %c0_98 = arith.constant 0 : index
    %c0_99 = arith.constant 0 : index
    %95 = vector.load %arg4[%c1_97, %c0_98, %c0_99] : memref<2x32x32xf32, #tpu.memory_space<vmem>>, vector<1x32x32xf32>
    %96 = vector.shape_cast %95 : vector<1x32x32xf32> to vector<32x32xf32>
    %97 = vector.shape_cast %94 : vector<32x32xf32> to vector<1x32x32xf32>
    tpu.vector_store %arg4[%c1_97, %c0_98, %c0_99], %97 {strides = array<i32>} : memref<2x32x32xf32, #tpu.memory_space<vmem>>, vector<1x32x32xf32>,
    %c3_100 = arith.constant 3 : index
    %c0_101 = arith.constant 0 : index
    %c0_102 = arith.constant 0 : index
    %98 = vector.load %arg1[%c3_100, %c0_101, %c0_102] : memref<4x32x24xbf16, #tpu.memory_space<vmem>>, vector<1x32x24xbf16>
    %99 = vector.shape_cast %98 : vector<1x32x24xbf16> to vector<32x24xbf16>
    %cst_103 = arith.constant dense<0.000000e+00> : vector<32x40xf32>
    %100 = tpu.matmul %99, %58, %cst_103 {dimension_numbers = #tpu.dot_dimension_numbers<[1], [0], [0], [1], [0, 0, 1, 1], [], []>} : vector<32x24xbf16>, vector<24x40xbf16>, vector<32x40xf32> -> vector<32x40xf32>
    %c1_104 = arith.constant 1 : index
    %c0_105 = arith.constant 0 : index
    %c0_106 = arith.constant 0 : index
    %101 = vector.load %arg4[%c1_104, %c0_105, %c0_106] : memref<2x32x32xf32, #tpu.memory_space<vmem>>, vector<1x32x32xf32>
    %102 = vector.shape_cast %101 : vector<1x32x32xf32> to vector<32x32xf32>
    %103 = arith.truncf %100 : vector<32x40xf32> to vector<32x40xbf16>
    %c3_107 = arith.constant 3 : index
    %c0_108 = arith.constant 0 : index
    %c0_109 = arith.constant 0 : index
    %104 = vector.load %arg3[%c3_107, %c0_108, %c0_109] : memref<4x32x40xbf16, #tpu.memory_space<vmem>>, vector<1x32x40xbf16>
    %105 = vector.shape_cast %104 : vector<1x32x40xbf16> to vector<32x40xbf16>
    %cst_110 = arith.constant dense<0.000000e+00> : vector<32x32xf32>
    %106 = tpu.matmul %103, %105, %cst_110 {dimension_numbers = #tpu.dot_dimension_numbers<[1], [1], [0], [0], [0, 0, 1, 0], [], []>} : vector<32x40xbf16>, vector<32x40xbf16>, vector<32x32xf32> -> vector<32x32xf32>
    %107 = arith.addf %102, %106 : vector<32x32xf32>
    %c1_111 = arith.constant 1 : index
    %c0_112 = arith.constant 0 : index
    %c0_113 = arith.constant 0 : index
    %108 = vector.load %arg4[%c1_111, %c0_112, %c0_113] : memref<2x32x32xf32, #tpu.memory_space<vmem>>, vector<1x32x32xf32>
    %109 = vector.shape_cast %108 : vector<1x32x32xf32> to vector<32x32xf32>
    %110 = vector.shape_cast %107 : vector<32x32xf32> to vector<1x32x32xf32>
    tpu.vector_store %arg4[%c1_111, %c0_112, %c0_113], %110 {strides = array<i32>} : memref<2x32x32xf32, #tpu.memory_space<vmem>>, vector<1x32x32xf32>,
    return
  }
  func.func @transform_0(%arg0: i32) -> (i32, i32, i32) {
    %c0_i32 = arith.constant 0 : i32
    %c0_i32_0 = arith.constant 0 : i32
    %c0_i32_1 = arith.constant 0 : i32
    return %arg0, %c0_i32, %c0_i32_0 : i32, i32, i32
  }
  func.func @transform_1(%arg0: i32) -> (i32, i32, i32) {
    %c0_i32 = arith.constant 0 : i32
    %c0_i32_0 = arith.constant 0 : i32
    %c0_i32_1 = arith.constant 0 : i32
    %c0_i32_2 = arith.constant 0 : i32
    return %c0_i32, %c0_i32_0, %c0_i32_1 : i32, i32, i32
  }
  func.func @transform_2(%arg0: i32) -> (i32, i32, i32) {
    %c0_i32 = arith.constant 0 : i32
    %c0_i32_0 = arith.constant 0 : i32
    %c0_i32_1 = arith.constant 0 : i32
    return %arg0, %c0_i32, %c0_i32_0 : i32, i32, i32
  }
  func.func @transform_3(%arg0: i32) -> (i32, i32, i32) {
    %c0_i32 = arith.constant 0 : i32
    %c0_i32_0 = arith.constant 0 : i32
    %c0_i32_1 = arith.constant 0 : i32
    %c0_i32_2 = arith.constant 0 : i32
    return %c0_i32, %c0_i32_0, %c0_i32_1 : i32, i32, i32
  }
}

</mosaic_0001>

<llo_original>
// kernel: tpu_custom_call.1
$region0: #{tpu_custom_call.1}
  #allocation0 [shape = 'u32[]', space=smem, size = 0x4, offset = 0x4, fixed_abs, tag = 'smem constant byte address 0x4 - core index']
  #allocation1 [shape = 'u32[144,128]{1,0:T(1,128)}', space=vmem, size = 0x12000, scoped, tag = 'internal scratch']
  %s0 = inlined_call_operand.vmem [shape: bf16[4,32,24], index: 0, kind: input, shape index: {}]
  %s1 = inlined_call_operand.vmem [shape: bf16[2,24,40], index: 1, kind: input, shape index: {}]
  %s2 = inlined_call_operand.vmem [shape: bf16[4,32,40], index: 2, kind: input, shape index: {}]
  %s3 = inlined_call_operand.hbm [shape: f32[2,32,32], index: 3, kind: output, shape index: {}]
  %s4 = sld [smem:[#allocation0]]
  $region26: #{tpu_custom_call.1} parent=0
    _
  %s6 = ssub.s32 1, %s4
  %s7 = scalar_select 0, %s6, %s4
  $region1: #{tpu_custom_call.1} parent=0
    #allocation2 [shape = 'u8[32768]{0}', space=vmem, size = 0x8000, scoped, tag = 'output window, operand 0, single buffered']
    #allocation3 [shape = 's32[1]{0}', space=sflag, size = 0x4, scoped, tag = 'scoped memory for tpu_custom_call.1']
    %8 = vsyncpa [#allocation3], 0
    // Predicated region
    $region2: #{tpu_custom_call.1} parent=1 // pred_check
      _
    $region3: #{tpu_custom_call.1} parent=1 // pred_check_branch
      %10 = sbr.rel (0) target = $region5
    $region4: #{tpu_custom_call.1} parent=1 // pred_region
      _
    $region5: #{tpu_custom_call.1} parent=1 // pred_fallthru
      _
    // Predicated region
    $region6: #{tpu_custom_call.1} parent=1 // pred_check
      _
    $region7: #{tpu_custom_call.1} parent=1 // pred_check_branch
      %12 = sbr.rel (0) target = $region9
    $region8: #{tpu_custom_call.1} parent=1 // pred_region
      _
    $region9: #{tpu_custom_call.1} parent=1 // pred_fallthru
      _
    // Predicated region
    $region10: #{tpu_custom_call.1} parent=1 // pred_check
      _
    $region11: #{tpu_custom_call.1} parent=1 // pred_check_branch
      %14 = sbr.rel (0) target = $region13
    $region12: #{tpu_custom_call.1} parent=1 // pred_region
      _
    $region13: #{tpu_custom_call.1} parent=1 // pred_fallthru
      _
    %p16 = scmp.eq.s32.totalorder 0, 0
    // Predicated region
    $region14: #{tpu_custom_call.1} parent=1 // pred_check
      %p17 = pneg %p16
    $region15: #{tpu_custom_call.1} parent=1 // pred_check_branch
      %19 = sbr.rel (%p17) target = $region17
    $region16: #{tpu_custom_call.1} parent=1 // pred_region
      %vm20 = vcmask 261120
      %21 = vst.msk [vmem:[#allocation2] sm:$0xff] %vm20, 0.0
      %22 = vst.msk [vmem:[#allocation2 + $0x8] sm:$0xff] %vm20, 0.0
      %23 = vst.msk [vmem:[#allocation2 + $0x10] sm:$0xff] %vm20, 0.0
      %24 = vst.msk [vmem:[#allocation2 + $0x18] sm:$0xff] %vm20, 0.0
      %25 = vst.msk [vmem:[#allocation2 + $0x20] sm:$0xff] %vm20, 0.0
      %26 = vst.msk [vmem:[#allocation2 + $0x28] sm:$0xff] %vm20, 0.0
      %27 = vst.msk [vmem:[#allocation2 + $0x30] sm:$0xff] %vm20, 0.0
      %28 = vst.msk [vmem:[#allocation2 + $0x38] sm:$0xff] %vm20, 0.0
    $region17: #{tpu_custom_call.1} parent=1 // pred_fallthru
      _
    %v29 = vld [vmem:[%s1] sm:$0xf]
    %v30 = vld [vmem:[%s1 + $0x4] sm:$0xf]
    %v31 = vld [vmem:[%s1 + $0x8] sm:$0xf]
    %v32 = vld [vmem:[%s0] sm:$0xf]
    %v33 = vld [vmem:[%s0 + $0x4] sm:$0xf]
    %v34 = vld [vmem:[%s0 + $0x8] sm:$0xf]
    %v35 = vld [vmem:[%s0 + $0xc] sm:$0xf]
    %v40 = vunpack.c.l.b16 %v32
    %v41 = vunpack.c.l.b16 %v33
    %v42 = vunpack.c.l.b16 %v34
    %v43 = vunpack.c.l.b16 %v35
    %v44 = vpack.c.b16 %v41, %v40
    %v45 = vpack.c.b16 %v43, %v42
    %v49 = vunpack.c.l.b16 %v29
    %v50 = vunpack.c.l.b16 %v30
    %v51 = vunpack.c.l.b16 %v31
    %v52 = vpack.c.b16 %v50, %v49
    %v53 = vpack.c.b16 %v51, %v51
    %vm55 = vcmask 195584
    %v57 = vsel %vm55, %v44, 0
    %v60 = vsel %vm55, %v45, 0
    %vm62 = vcmask 1043456
    %v64 = vsel %vm62, %v53, 0
    %66 = vmatprep.subr.bf16.mxu0 0
    %67 = vmatpush1.bf16.msra.mxu0 %v52
    %68 = vmatprep.subr.bf16.mxu0 0
    %69 = vmatpush1.bf16.msra.mxu0 %v64
    %70 = vmatprep.subr.bf16.mxu0 0
    %71 = vmatpush1.bf16.msra.mxu0 0
    %72 = vmatprep.subr.bf16.mxu0 0
    %73 = vmatpush1.bf16.msra.mxu0 0
    %74 = vmatprep.subr.bf16.mxu0 0
    %75 = vmatpush1.bf16.msra.mxu0 0
    %76 = vmatprep.subr.bf16.mxu0 0
    %77 = vmatpush1.bf16.msra.mxu0 0
    %78 = vmatprep.subr.bf16.mxu0 0
    %79 = vmatpush1.bf16.msra.mxu0 0
    %80 = vmatprep.subr.bf16.mxu0 0
    %81 = vmatpush1.bf16.msra.mxu0 0
    %82 = vmatprep.subr.bf16.mxu0 0
    %83 = vmatpush1.bf16.msra.mxu0 0
    %84 = vmatprep.subr.bf16.mxu0 0
    %85 = vmatpush1.bf16.msra.mxu0 0
    %86 = vmatprep.subr.bf16.mxu0 0
    %87 = vmatpush1.bf16.msra.mxu0 0
    %88 = vmatprep.subr.bf16.mxu0 0
    %89 = vmatpush1.bf16.msra.mxu0 0
    %90 = vmatprep.subr.bf16.mxu0 0
    %91 = vmatpush1.bf16.msra.mxu0 0
    %92 = vmatprep.subr.bf16.mxu0 0
    %93 = vmatpush1.bf16.msra.mxu0 0
    %94 = vmatprep.subr.bf16.mxu0 0
    %95 = vmatpush1.bf16.msra.mxu0 0
    %96 = vmatprep.subr.bf16.mxu0 0
    %97 = vmatpush1.bf16.msra.mxu0 0
    %98 = vmatprep.mubr.bf16.mxu0 0
    %99 = vmatmul.mubr.bf16.gmra.mrb[0].mxu0 %v57
    %v100 = vpop.f32.mrb[0].mxu0
    %v101 = vadd.f32 0.0, %v100
    %v102 = vpop.f32.mrb[0].mxu0
    %v103 = vpop.f32.mrb[0].mxu0
    %v104 = vadd.f32 0.0, %v103
    %v105 = vpop.f32.mrb[0].mxu0
    %106 = vmatprep.mubr.bf16.mxu0 0
    %107 = vmatmul.mubr.bf16.gmra.mrb[0].mxu0 %v60
    %v108 = vpop.f32.mrb[0].mxu0
    %v109 = vadd.f32 0.0, %v108
    %v110 = vpop.f32.mrb[0].mxu0
    %v111 = vpop.f32.mrb[0].mxu0
    %v112 = vadd.f32 0.0, %v111
    %v113 = vpop.f32.mrb[0].mxu0
    %114 = vdwg.mxu0
    %v115 = vld [vmem:[#allocation2] sm:$0xff]
    %v116 = vld [vmem:[#allocation2 + $0x8] sm:$0xff]
    %v117 = vld [vmem:[#allocation2 + $0x10] sm:$0xff]
    %v118 = vld [vmem:[#allocation2 + $0x18] sm:$0xff]
    %v119 = vpack.c.bf16 %v104, %v101
    %v120 = vpack.c.bf16 %v112, %v109
    %v121 = vld [vmem:[%s2] sm:$0xf]
    %v122 = vld [vmem:[%s2 + $0x4] sm:$0xf]
    %v123 = vld [vmem:[%s2 + $0x8] sm:$0xf]
    %v124 = vld [vmem:[%s2 + $0xc] sm:$0xf]
    %v129 = vunpack.c.l.b16 %v121
    %v130 = vunpack.c.l.b16 %v122
    %v131 = vunpack.c.l.b16 %v123
    %v132 = vunpack.c.l.b16 %v124
    %v133 = vpack.c.b16 %v130, %v129
    %v134 = vpack.c.b16 %v132, %v131
    %vm135 = vcmask 326656
    %v137 = vsel %vm135, %v119, 0
    %v140 = vsel %vm135, %v120, 0
    %v143 = vsel %vm135, %v133, 0
    %v146 = vsel %vm135, %v134, 0
    %148 = vmatprep.subr.bf16.mxu0 0
    %149 = vmatpush1.bf16.xpose.msra.mxu0 %v143
    %150 = vmatprep.subr.bf16.mxu0 0
    %151 = vmatpush1.bf16.xpose.msra.mxu0 %v146
    %152 = vmatprep.subr.bf16.mxu0 0
    %153 = vmatpush1.bf16.xpose.msra.mxu0 0
    %154 = vmatprep.subr.bf16.mxu0 0
    %155 = vmatpush1.bf16.xpose.msra.mxu0 0
    %156 = vmatprep.subr.bf16.mxu0 0
    %157 = vmatpush1.bf16.xpose.msra.mxu0 0
    %158 = vmatprep.subr.bf16.mxu0 0
    %159 = vmatpush1.bf16.xpose.msra.mxu0 0
    %160 = vmatprep.subr.bf16.mxu0 0
    %161 = vmatpush1.bf16.xpose.msra.mxu0 0
    %162 = vmatprep.subr.bf16.mxu0 0
    %163 = vmatpush1.bf16.xpose.msra.mxu0 0
    %164 = vmatprep.subr.bf16.mxu0 0
    %165 = vmatpush1.bf16.xpose.msra.mxu0 0
    %166 = vmatprep.subr.bf16.mxu0 0
    %167 = vmatpush1.bf16.xpose.msra.mxu0 0
    %168 = vmatprep.subr.bf16.mxu0 0
    %169 = vmatpush1.bf16.xpose.msra.mxu0 0
    %170 = vmatprep.subr.bf16.mxu0 0
    %171 = vmatpush1.bf16.xpose.msra.mxu0 0
    %172 = vmatprep.subr.bf16.mxu0 0
    %173 = vmatpush1.bf16.xpose.msra.mxu0 0
    %174 = vmatprep.subr.bf16.mxu0 0
    %175 = vmatpush1.bf16.xpose.msra.mxu0 0
    %176 = vmatprep.subr.bf16.mxu0 0
    %177 = vmatpush1.bf16.xpose.msra.mxu0 0
    %178 = vmatprep.subr.bf16.mxu0 0
    %179 = vmatpush1.bf16.xpose.msra.mxu0 0
    %180 = vmatprep.mubr.bf16.mxu0 0
    %181 = vmatmul.mubr.bf16.gmra.mrb[0].mxu0 %v137
    %v182 = vpop.f32.mrb[0].mxu0
    %v183 = vadd.f32 0.0, %v182
    %v184 = vpop.f32.mrb[0].mxu0
    %v185 = vpop.f32.mrb[0].mxu0
    %v186 = vadd.f32 0.0, %v185
    %v187 = vpop.f32.mrb[0].mxu0
    %188 = vmatprep.mubr.bf16.mxu0 0
    %189 = vmatmul.mubr.bf16.gmra.mrb[0].mxu0 %v140
    %v190 = vpop.f32.mrb[0].mxu0
    %v191 = vadd.f32 0.0, %v190
    %v192 = vpop.f32.mrb[0].mxu0
    %v193 = vpop.f32.mrb[0].mxu0
    %v194 = vadd.f32 0.0, %v193
    %v195 = vpop.f32.mrb[0].mxu0
    %196 = vdwg.mxu0
    %v197 = vadd.f32 %v115, %v183
    %v198 = vadd.f32 %v116, %v186
    %v199 = vadd.f32 %v117, %v191
    %v200 = vadd.f32 %v118, %v194
    %vm201 = vcmask 261120
    %202 = vst.msk [vmem:[#allocation2] sm:$0xff] %vm201, %v197
    %203 = vst.msk [vmem:[#allocation2 + $0x8] sm:$0xff] %vm201, %v198
    %204 = vst.msk [vmem:[#allocation2 + $0x10] sm:$0xff] %vm201, %v199
    %205 = vst.msk [vmem:[#allocation2 + $0x18] sm:$0xff] %vm201, %v200
    %s206 = scalar_lea.vmem %s0, 16
    %v207 = vld [vmem:[%s206] sm:$0xf]
    %v208 = vld [vmem:[%s206 + $0x4] sm:$0xf]
    %v209 = vld [vmem:[%s206 + $0x8] sm:$0xf]
    %v210 = vld [vmem:[%s206 + $0xc] sm:$0xf]
    %v215 = vunpack.c.l.b16 %v207
    %v216 = vunpack.c.l.b16 %v208
    %v217 = vunpack.c.l.b16 %v209
    %v218 = vunpack.c.l.b16 %v210
    %v219 = vpack.c.b16 %v216, %v215
    %v220 = vpack.c.b16 %v218, %v217
    %v222 = vsel %vm55, %v219, 0
    %v225 = vsel %vm55, %v220, 0
    %227 = vmatprep.subr.bf16.mxu0 0
    %228 = vmatpush1.bf16.msra.mxu0 %v52
    %229 = vmatprep.subr.bf16.mxu0 0
    %230 = vmatpush1.bf16.msra.mxu0 %v64
    %231 = vmatprep.subr.bf16.mxu0 0
    %232 = vmatpush1.bf16.msra.mxu0 0
    %233 = vmatprep.subr.bf16.mxu0 0
    %234 = vmatpush1.bf16.msra.mxu0 0
    %235 = vmatprep.subr.bf16.mxu0 0
    %236 = vmatpush1.bf16.msra.mxu0 0
    %237 = vmatprep.subr.bf16.mxu0 0
    %238 = vmatpush1.bf16.msra.mxu0 0
    %239 = vmatprep.subr.bf16.mxu0 0
    %240 = vmatpush1.bf16.msra.mxu0 0
    %241 = vmatprep.subr.bf16.mxu0 0
    %242 = vmatpush1.bf16.msra.mxu0 0
    %243 = vmatprep.subr.bf16.mxu0 0
    %244 = vmatpush1.bf16.msra.mxu0 0
    %245 = vmatprep.subr.bf16.mxu0 0
    %246 = vmatpush1.bf16.msra.mxu0 0
    %247 = vmatprep.subr.bf16.mxu0 0
    %248 = vmatpush1.bf16.msra.mxu0 0
    %249 = vmatprep.subr.bf16.mxu0 0
    %250 = vmatpush1.bf16.msra.mxu0 0
    %251 = vmatprep.subr.bf16.mxu0 0
    %252 = vmatpush1.bf16.msra.mxu0 0
    %253 = vmatprep.subr.bf16.mxu0 0
    %254 = vmatpush1.bf16.msra.mxu0 0
    %255 = vmatprep.subr.bf16.mxu0 0
    %256 = vmatpush1.bf16.msra.mxu0 0
    %257 = vmatprep.subr.bf16.mxu0 0
    %258 = vmatpush1.bf16.msra.mxu0 0
    %259 = vmatprep.mubr.bf16.mxu0 0
    %260 = vmatmul.mubr.bf16.gmra.mrb[0].mxu0 %v222
    %v261 = vpop.f32.mrb[0].mxu0
    %v262 = vadd.f32 0.0, %v261
    %v263 = vpop.f32.mrb[0].mxu0
    %v264 = vpop.f32.mrb[0].mxu0
    %v265 = vadd.f32 0.0, %v264
    %v266 = vpop.f32.mrb[0].mxu0
    %267 = vmatprep.mubr.bf16.mxu0 0
    %268 = vmatmul.mubr.bf16.gmra.mrb[0].mxu0 %v225
    %v269 = vpop.f32.mrb[0].mxu0
    %v270 = vadd.f32 0.0, %v269
    %v271 = vpop.f32.mrb[0].mxu0
    %v272 = vpop.f32.mrb[0].mxu0
    %v273 = vadd.f32 0.0, %v272
    %v274 = vpop.f32.mrb[0].mxu0
    %275 = vdwg.mxu0
    %v276 = vld [vmem:[#allocation2] sm:$0xff]
    %v277 = vld [vmem:[#allocation2 + $0x8] sm:$0xff]
    %v278 = vld [vmem:[#allocation2 + $0x10] sm:$0xff]
    %v279 = vld [vmem:[#allocation2 + $0x18] sm:$0xff]
    %v280 = vpack.c.bf16 %v265, %v262
    %v281 = vpack.c.bf16 %v273, %v270
    %s282 = scalar_lea.vmem %s2, 16
    %v283 = vld [vmem:[%s282] sm:$0xf]
    %v284 = vld [vmem:[%s282 + $0x4] sm:$0xf]
    %v285 = vld [vmem:[%s282 + $0x8] sm:$0xf]
    %v286 = vld [vmem:[%s282 + $0xc] sm:$0xf]
    %v291 = vunpack.c.l.b16 %v283
    %v292 = vunpack.c.l.b16 %v284
    %v293 = vunpack.c.l.b16 %v285
    %v294 = vunpack.c.l.b16 %v286
    %v295 = vpack.c.b16 %v292, %v291
    %v296 = vpack.c.b16 %v294, %v293
    %v298 = vsel %vm135, %v280, 0
    %v301 = vsel %vm135, %v281, 0
    %v304 = vsel %vm135, %v295, 0
    %v307 = vsel %vm135, %v296, 0
    %309 = vmatprep.subr.bf16.mxu0 0
    %310 = vmatpush1.bf16.xpose.msra.mxu0 %v304
    %311 = vmatprep.subr.bf16.mxu0 0
    %312 = vmatpush1.bf16.xpose.msra.mxu0 %v307
    %313 = vmatprep.subr.bf16.mxu0 0
    %314 = vmatpush1.bf16.xpose.msra.mxu0 0
    %315 = vmatprep.subr.bf16.mxu0 0
    %316 = vmatpush1.bf16.xpose.msra.mxu0 0
    %317 = vmatprep.subr.bf16.mxu0 0
    %318 = vmatpush1.bf16.xpose.msra.mxu0 0
    %319 = vmatprep.subr.bf16.mxu0 0
    %320 = vmatpush1.bf16.xpose.msra.mxu0 0
    %321 = vmatprep.subr.bf16.mxu0 0
    %322 = vmatpush1.bf16.xpose.msra.mxu0 0
    %323 = vmatprep.subr.bf16.mxu0 0
    %324 = vmatpush1.bf16.xpose.msra.mxu0 0
    %325 = vmatprep.subr.bf16.mxu0 0
    %326 = vmatpush1.bf16.xpose.msra.mxu0 0
    %327 = vmatprep.subr.bf16.mxu0 0
    %328 = vmatpush1.bf16.xpose.msra.mxu0 0
    %329 = vmatprep.subr.bf16.mxu0 0
    %330 = vmatpush1.bf16.xpose.msra.mxu0 0
    %331 = vmatprep.subr.bf16.mxu0 0
    %332 = vmatpush1.bf16.xpose.msra.mxu0 0
    %333 = vmatprep.subr.bf16.mxu0 0
    %334 = vmatpush1.bf16.xpose.msra.mxu0 0
    %335 = vmatprep.subr.bf16.mxu0 0
    %336 = vmatpush1.bf16.xpose.msra.mxu0 0
    %337 = vmatprep.subr.bf16.mxu0 0
    %338 = vmatpush1.bf16.xpose.msra.mxu0 0
    %339 = vmatprep.subr.bf16.mxu0 0
    %340 = vmatpush1.bf16.xpose.msra.mxu0 0
    %341 = vmatprep.mubr.bf16.mxu0 0
    %342 = vmatmul.mubr.bf16.gmra.mrb[0].mxu0 %v298
    %v343 = vpop.f32.mrb[0].mxu0
    %v344 = vadd.f32 0.0, %v343
    %v345 = vpop.f32.mrb[0].mxu0
    %v346 = vpop.f32.mrb[0].mxu0
    %v347 = vadd.f32 0.0, %v346
    %v348 = vpop.f32.mrb[0].mxu0
    %349 = vmatprep.mubr.bf16.mxu0 0
    %350 = vmatmul.mubr.bf16.gmra.mrb[0].mxu0 %v301
    %v351 = vpop.f32.mrb[0].mxu0
    %v352 = vadd.f32 0.0, %v351
    %v353 = vpop.f32.mrb[0].mxu0
    %v354 = vpop.f32.mrb[0].mxu0
    %v355 = vadd.f32 0.0, %v354
    %v356 = vpop.f32.mrb[0].mxu0
    %357 = vdwg.mxu0
    %v358 = vadd.f32 %v276, %v344
    %v359 = vadd.f32 %v277, %v347
    %v360 = vadd.f32 %v278, %v352
    %v361 = vadd.f32 %v279, %v355
    %362 = vst.msk [vmem:[#allocation2] sm:$0xff] %vm201, %v358
    %363 = vst.msk [vmem:[#allocation2 + $0x8] sm:$0xff] %vm201, %v359
    %364 = vst.msk [vmem:[#allocation2 + $0x10] sm:$0xff] %vm201, %v360
    %365 = vst.msk [vmem:[#allocation2 + $0x18] sm:$0xff] %vm201, %v361
    %s366 = scalar_lea.vmem %s0, 32
    %v367 = vld [vmem:[%s366] sm:$0xf]
    %v368 = vld [vmem:[%s366 + $0x4] sm:$0xf]
    %v369 = vld [vmem:[%s366 + $0x8] sm:$0xf]
    %v370 = vld [vmem:[%s366 + $0xc] sm:$0xf]
    %v375 = vunpack.c.l.b16 %v367
    %v376 = vunpack.c.l.b16 %v368
    %v377 = vunpack.c.l.b16 %v369
    %v378 = vunpack.c.l.b16 %v370
    %v379 = vpack.c.b16 %v376, %v375
    %v380 = vpack.c.b16 %v378, %v377
    %v382 = vsel %vm55, %v379, 0
    %v385 = vsel %vm55, %v380, 0
    %387 = vmatprep.subr.bf16.mxu0 0
    %388 = vmatpush1.bf16.msra.mxu0 %v52
    %389 = vmatprep.subr.bf16.mxu0 0
    %390 = vmatpush1.bf16.msra.mxu0 %v64
    %391 = vmatprep.subr.bf16.mxu0 0
    %392 = vmatpush1.bf16.msra.mxu0 0
    %393 = vmatprep.subr.bf16.mxu0 0
    %394 = vmatpush1.bf16.msra.mxu0 0
    %395 = vmatprep.subr.bf16.mxu0 0
    %396 = vmatpush1.bf16.msra.mxu0 0
    %397 = vmatprep.subr.bf16.mxu0 0
    %398 = vmatpush1.bf16.msra.mxu0 0
    %399 = vmatprep.subr.bf16.mxu0 0
    %400 = vmatpush1.bf16.msra.mxu0 0
    %401 = vmatprep.subr.bf16.mxu0 0
    %402 = vmatpush1.bf16.msra.mxu0 0
    %403 = vmatprep.subr.bf16.mxu0 0
    %404 = vmatpush1.bf16.msra.mxu0 0
    %405 = vmatprep.subr.bf16.mxu0 0
    %406 = vmatpush1.bf16.msra.mxu0 0
    %407 = vmatprep.subr.bf16.mxu0 0
    %408 = vmatpush1.bf16.msra.mxu0 0
    %409 = vmatprep.subr.bf16.mxu0 0
    %410 = vmatpush1.bf16.msra.mxu0 0
    %411 = vmatprep.subr.bf16.mxu0 0
    %412 = vmatpush1.bf16.msra.mxu0 0
    %413 = vmatprep.subr.bf16.mxu0 0
    %414 = vmatpush1.bf16.msra.mxu0 0
    %415 = vmatprep.subr.bf16.mxu0 0
    %416 = vmatpush1.bf16.msra.mxu0 0
    %417 = vmatprep.subr.bf16.mxu0 0
    %418 = vmatpush1.bf16.msra.mxu0 0
    %419 = vmatprep.mubr.bf16.mxu0 0
    %420 = vmatmul.mubr.bf16.gmra.mrb[0].mxu0 %v382
    %v421 = vpop.f32.mrb[0].mxu0
    %v422 = vadd.f32 0.0, %v421
    %v423 = vpop.f32.mrb[0].mxu0
    %v424 = vpop.f32.mrb[0].mxu0
    %v425 = vadd.f32 0.0, %v424
    %v426 = vpop.f32.mrb[0].mxu0
    %427 = vmatprep.mubr.bf16.mxu0 0
    %428 = vmatmul.mubr.bf16.gmra.mrb[0].mxu0 %v385
    %v429 = vpop.f32.mrb[0].mxu0
    %v430 = vadd.f32 0.0, %v429
    %v431 = vpop.f32.mrb[0].mxu0
    %v432 = vpop.f32.mrb[0].mxu0
    %v433 = vadd.f32 0.0, %v432
    %v434 = vpop.f32.mrb[0].mxu0
    %435 = vdwg.mxu0
    %v436 = vld [vmem:[#allocation2] sm:$0xff]
    %v437 = vld [vmem:[#allocation2 + $0x8] sm:$0xff]
    %v438 = vld [vmem:[#allocation2 + $0x10] sm:$0xff]
    %v439 = vld [vmem:[#allocation2 + $0x18] sm:$0xff]
    %v440 = vpack.c.bf16 %v425, %v422
    %v441 = vpack.c.bf16 %v433, %v430
    %s442 = scalar_lea.vmem %s2, 32
    %v443 = vld [vmem:[%s442] sm:$0xf]
    %v444 = vld [vmem:[%s442 + $0x4] sm:$0xf]
    %v445 = vld [vmem:[%s442 + $0x8] sm:$0xf]
    %v446 = vld [vmem:[%s442 + $0xc] sm:$0xf]
    %v451 = vunpack.c.l.b16 %v443
    %v452 = vunpack.c.l.b16 %v444
    %v453 = vunpack.c.l.b16 %v445
    %v454 = vunpack.c.l.b16 %v446
    %v455 = vpack.c.b16 %v452, %v451
    %v456 = vpack.c.b16 %v454, %v453
    %v458 = vsel %vm135, %v440, 0
    %v461 = vsel %vm135, %v441, 0
    %v464 = vsel %vm135, %v455, 0
    %v467 = vsel %vm135, %v456, 0
    %469 = vmatprep.subr.bf16.mxu0 0
    %470 = vmatpush1.bf16.xpose.msra.mxu0 %v464
    %471 = vmatprep.subr.bf16.mxu0 0
    %472 = vmatpush1.bf16.xpose.msra.mxu0 %v467
    %473 = vmatprep.subr.bf16.mxu0 0
    %474 = vmatpush1.bf16.xpose.msra.mxu0 0
    %475 = vmatprep.subr.bf16.mxu0 0
    %476 = vmatpush1.bf16.xpose.msra.mxu0 0
    %477 = vmatprep.subr.bf16.mxu0 0
    %478 = vmatpush1.bf16.xpose.msra.mxu0 0
    %479 = vmatprep.subr.bf16.mxu0 0
    %480 = vmatpush1.bf16.xpose.msra.mxu0 0
    %481 = vmatprep.subr.bf16.mxu0 0
    %482 = vmatpush1.bf16.xpose.msra.mxu0 0
    %483 = vmatprep.subr.bf16.mxu0 0
    %484 = vmatpush1.bf16.xpose.msra.mxu0 0
    %485 = vmatprep.subr.bf16.mxu0 0
    %486 = vmatpush1.bf16.xpose.msra.mxu0 0
    %487 = vmatprep.subr.bf16.mxu0 0
    %488 = vmatpush1.bf16.xpose.msra.mxu0 0
    %489 = vmatprep.subr.bf16.mxu0 0
    %490 = vmatpush1.bf16.xpose.msra.mxu0 0
    %491 = vmatprep.subr.bf16.mxu0 0
    %492 = vmatpush1.bf16.xpose.msra.mxu0 0
    %493 = vmatprep.subr.bf16.mxu0 0
    %494 = vmatpush1.bf16.xpose.msra.mxu0 0
    %495 = vmatprep.subr.bf16.mxu0 0
    %496 = vmatpush1.bf16.xpose.msra.mxu0 0
    %497 = vmatprep.subr.bf16.mxu0 0
    %498 = vmatpush1.bf16.xpose.msra.mxu0 0
    %499 = vmatprep.subr.bf16.mxu0 0
    %500 = vmatpush1.bf16.xpose.msra.mxu0 0
    %501 = vmatprep.mubr.bf16.mxu0 0
    %502 = vmatmul.mubr.bf16.gmra.mrb[0].mxu0 %v458
    %v503 = vpop.f32.mrb[0].mxu0
    %v504 = vadd.f32 0.0, %v503
    %v505 = vpop.f32.mrb[0].mxu0
    %v506 = vpop.f32.mrb[0].mxu0
    %v507 = vadd.f32 0.0, %v506
    %v508 = vpop.f32.mrb[0].mxu0
    %509 = vmatprep.mubr.bf16.mxu0 0
    %510 = vmatmul.mubr.bf16.gmra.mrb[0].mxu0 %v461
    %v511 = vpop.f32.mrb[0].mxu0
    %v512 = vadd.f32 0.0, %v511
    %v513 = vpop.f32.mrb[0].mxu0
    %v514 = vpop.f32.mrb[0].mxu0
    %v515 = vadd.f32 0.0, %v514
    %v516 = vpop.f32.mrb[0].mxu0
    %517 = vdwg.mxu0
    %v518 = vadd.f32 %v436, %v504
    %v519 = vadd.f32 %v437, %v507
    %v520 = vadd.f32 %v438, %v512
    %v521 = vadd.f32 %v439, %v515
    %522 = vst.msk [vmem:[#allocation2] sm:$0xff] %vm201, %v518
    %523 = vst.msk [vmem:[#allocation2 + $0x8] sm:$0xff] %vm201, %v519
    %524 = vst.msk [vmem:[#allocation2 + $0x10] sm:$0xff] %vm201, %v520
    %525 = vst.msk [vmem:[#allocation2 + $0x18] sm:$0xff] %vm201, %v521
    %s526 = scalar_lea.vmem %s0, 48
    %v527 = vld [vmem:[%s526] sm:$0xf]
    %v528 = vld [vmem:[%s526 + $0x4] sm:$0xf]
    %v529 = vld [vmem:[%s526 + $0x8] sm:$0xf]
    %v530 = vld [vmem:[%s526 + $0xc] sm:$0xf]
    %v535 = vunpack.c.l.b16 %v527
    %v536 = vunpack.c.l.b16 %v528
    %v537 = vunpack.c.l.b16 %v529
    %v538 = vunpack.c.l.b16 %v530
    %v539 = vpack.c.b16 %v536, %v535
    %v540 = vpack.c.b16 %v538, %v537
    %v542 = vsel %vm55, %v539, 0
    %v545 = vsel %vm55, %v540, 0
    %547 = vmatprep.subr.bf16.mxu0 0
    %548 = vmatpush1.bf16.msra.mxu0 %v52
    %549 = vmatprep.subr.bf16.mxu0 0
    %550 = vmatpush1.bf16.msra.mxu0 %v64
    %551 = vmatprep.subr.bf16.mxu0 0
    %552 = vmatpush1.bf16.msra.mxu0 0
    %553 = vmatprep.subr.bf16.mxu0 0
    %554 = vmatpush1.bf16.msra.mxu0 0
    %555 = vmatprep.subr.bf16.mxu0 0
    %556 = vmatpush1.bf16.msra.mxu0 0
    %557 = vmatprep.subr.bf16.mxu0 0
    %558 = vmatpush1.bf16.msra.mxu0 0
    %559 = vmatprep.subr.bf16.mxu0 0
    %560 = vmatpush1.bf16.msra.mxu0 0
    %561 = vmatprep.subr.bf16.mxu0 0
    %562 = vmatpush1.bf16.msra.mxu0 0
    %563 = vmatprep.subr.bf16.mxu0 0
    %564 = vmatpush1.bf16.msra.mxu0 0
    %565 = vmatprep.subr.bf16.mxu0 0
    %566 = vmatpush1.bf16.msra.mxu0 0
    %567 = vmatprep.subr.bf16.mxu0 0
    %568 = vmatpush1.bf16.msra.mxu0 0
    %569 = vmatprep.subr.bf16.mxu0 0
    %570 = vmatpush1.bf16.msra.mxu0 0
    %571 = vmatprep.subr.bf16.mxu0 0
    %572 = vmatpush1.bf16.msra.mxu0 0
    %573 = vmatprep.subr.bf16.mxu0 0
    %574 = vmatpush1.bf16.msra.mxu0 0
    %575 = vmatprep.subr.bf16.mxu0 0
    %576 = vmatpush1.bf16.msra.mxu0 0
    %577 = vmatprep.subr.bf16.mxu0 0
    %578 = vmatpush1.bf16.msra.mxu0 0
    %579 = vmatprep.mubr.bf16.mxu0 0
    %580 = vmatmul.mubr.bf16.gmra.mrb[0].mxu0 %v542
    %v581 = vpop.f32.mrb[0].mxu0
    %v582 = vadd.f32 0.0, %v581
    %v583 = vpop.f32.mrb[0].mxu0
    %v584 = vpop.f32.mrb[0].mxu0
    %v585 = vadd.f32 0.0, %v584
    %v586 = vpop.f32.mrb[0].mxu0
    %587 = vmatprep.mubr.bf16.mxu0 0
    %588 = vmatmul.mubr.bf16.gmra.mrb[0].mxu0 %v545
    %v589 = vpop.f32.mrb[0].mxu0
    %v590 = vadd.f32 0.0, %v589
    %v591 = vpop.f32.mrb[0].mxu0
    %v592 = vpop.f32.mrb[0].mxu0
    %v593 = vadd.f32 0.0, %v592
    %v594 = vpop.f32.mrb[0].mxu0
    %595 = vdwg.mxu0
    %v596 = vld [vmem:[#allocation2] sm:$0xff]
    %v597 = vld [vmem:[#allocation2 + $0x8] sm:$0xff]
    %v598 = vld [vmem:[#allocation2 + $0x10] sm:$0xff]
    %v599 = vld [vmem:[#allocation2 + $0x18] sm:$0xff]
    %v600 = vpack.c.bf16 %v585, %v582
    %v601 = vpack.c.bf16 %v593, %v590
    %s602 = scalar_lea.vmem %s2, 48
    %v603 = vld [vmem:[%s602] sm:$0xf]
    %v604 = vld [vmem:[%s602 + $0x4] sm:$0xf]
    %v605 = vld [vmem:[%s602 + $0x8] sm:$0xf]
    %v606 = vld [vmem:[%s602 + $0xc] sm:$0xf]
    %v611 = vunpack.c.l.b16 %v603
    %v612 = vunpack.c.l.b16 %v604
    %v613 = vunpack.c.l.b16 %v605
    %v614 = vunpack.c.l.b16 %v606
    %v615 = vpack.c.b16 %v612, %v611
    %v616 = vpack.c.b16 %v614, %v613
    %v618 = vsel %vm135, %v600, 0
    %v621 = vsel %vm135, %v601, 0
    %v624 = vsel %vm135, %v615, 0
    %v627 = vsel %vm135, %v616, 0
    %629 = vmatprep.subr.bf16.mxu0 0
    %630 = vmatpush1.bf16.xpose.msra.mxu0 %v624
    %631 = vmatprep.subr.bf16.mxu0 0
    %632 = vmatpush1.bf16.xpose.msra.mxu0 %v627
    %633 = vmatprep.subr.bf16.mxu0 0
    %634 = vmatpush1.bf16.xpose.msra.mxu0 0
    %635 = vmatprep.subr.bf16.mxu0 0
    %636 = vmatpush1.bf16.xpose.msra.mxu0 0
    %637 = vmatprep.subr.bf16.mxu0 0
    %638 = vmatpush1.bf16.xpose.msra.mxu0 0
    %639 = vmatprep.subr.bf16.mxu0 0
    %640 = vmatpush1.bf16.xpose.msra.mxu0 0
    %641 = vmatprep.subr.bf16.mxu0 0
    %642 = vmatpush1.bf16.xpose.msra.mxu0 0
    %643 = vmatprep.subr.bf16.mxu0 0
    %644 = vmatpush1.bf16.xpose.msra.mxu0 0
    %645 = vmatprep.subr.bf16.mxu0 0
    %646 = vmatpush1.bf16.xpose.msra.mxu0 0
    %647 = vmatprep.subr.bf16.mxu0 0
    %648 = vmatpush1.bf16.xpose.msra.mxu0 0
    %649 = vmatprep.subr.bf16.mxu0 0
    %650 = vmatpush1.bf16.xpose.msra.mxu0 0
    %651 = vmatprep.subr.bf16.mxu0 0
    %652 = vmatpush1.bf16.xpose.msra.mxu0 0
    %653 = vmatprep.subr.bf16.mxu0 0
    %654 = vmatpush1.bf16.xpose.msra.mxu0 0
    %655 = vmatprep.subr.bf16.mxu0 0
    %656 = vmatpush1.bf16.xpose.msra.mxu0 0
    %657 = vmatprep.subr.bf16.mxu0 0
    %658 = vmatpush1.bf16.xpose.msra.mxu0 0
    %659 = vmatprep.subr.bf16.mxu0 0
    %660 = vmatpush1.bf16.xpose.msra.mxu0 0
    %661 = vmatprep.mubr.bf16.mxu0 0
    %662 = vmatmul.mubr.bf16.gmra.mrb[0].mxu0 %v618
    %v663 = vpop.f32.mrb[0].mxu0
    %v664 = vadd.f32 0.0, %v663
    %v665 = vpop.f32.mrb[0].mxu0
    %v666 = vpop.f32.mrb[0].mxu0
    %v667 = vadd.f32 0.0, %v666
    %v668 = vpop.f32.mrb[0].mxu0
    %669 = vmatprep.mubr.bf16.mxu0 0
    %670 = vmatmul.mubr.bf16.gmra.mrb[0].mxu0 %v621
    %v671 = vpop.f32.mrb[0].mxu0
    %v672 = vadd.f32 0.0, %v671
    %v673 = vpop.f32.mrb[0].mxu0
    %v674 = vpop.f32.mrb[0].mxu0
    %v675 = vadd.f32 0.0, %v674
    %v676 = vpop.f32.mrb[0].mxu0
    %677 = vdwg.mxu0
    %v678 = vadd.f32 %v596, %v664
    %v679 = vadd.f32 %v597, %v667
    %v680 = vadd.f32 %v598, %v672
    %v681 = vadd.f32 %v599, %v675
    %682 = vst.msk [vmem:[#allocation2] sm:$0xff] %vm201, %v678
    %683 = vst.msk [vmem:[#allocation2 + $0x8] sm:$0xff] %vm201, %v679
    %684 = vst.msk [vmem:[#allocation2 + $0x10] sm:$0xff] %vm201, %v680
    %685 = vst.msk [vmem:[#allocation2 + $0x18] sm:$0xff] %vm201, %v681
    %s686 = scalar_lea.vmem %s1, 12
    %v687 = vld [vmem:[%s686] sm:$0xf]
    %v688 = vld [vmem:[%s686 + $0x4] sm:$0xf]
    %v689 = vld [vmem:[%s686 + $0x8] sm:$0xf]
    %v690 = vld [vmem:[%s0] sm:$0xf]
    %v691 = vld [vmem:[%s0 + $0x4] sm:$0xf]
    %v692 = vld [vmem:[%s0 + $0x8] sm:$0xf]
    %v693 = vld [vmem:[%s0 + $0xc] sm:$0xf]
    %v698 = vunpack.c.l.b16 %v690
    %v699 = vunpack.c.l.b16 %v691
    %v700 = vunpack.c.l.b16 %v692
    %v701 = vunpack.c.l.b16 %v693
    %v702 = vpack.c.b16 %v699, %v698
    %v703 = vpack.c.b16 %v701, %v700
    %v707 = vunpack.c.l.b16 %v687
    %v708 = vunpack.c.l.b16 %v688
    %v709 = vunpack.c.l.b16 %v689
    %v710 = vpack.c.b16 %v708, %v707
    %v711 = vpack.c.b16 %v709, %v709
    %v714 = vsel %vm55, %v702, 0
    %v717 = vsel %vm55, %v703, 0
    %v720 = vsel %vm62, %v711, 0
    %722 = vmatprep.subr.bf16.mxu0 0
    %723 = vmatpush1.bf16.msra.mxu0 %v710
    %724 = vmatprep.subr.bf16.mxu0 0
    %725 = vmatpush1.bf16.msra.mxu0 %v720
    %726 = vmatprep.subr.bf16.mxu0 0
    %727 = vmatpush1.bf16.msra.mxu0 0
    %728 = vmatprep.subr.bf16.mxu0 0
    %729 = vmatpush1.bf16.msra.mxu0 0
    %730 = vmatprep.subr.bf16.mxu0 0
    %731 = vmatpush1.bf16.msra.mxu0 0
    %732 = vmatprep.subr.bf16.mxu0 0
    %733 = vmatpush1.bf16.msra.mxu0 0
    %734 = vmatprep.subr.bf16.mxu0 0
    %735 = vmatpush1.bf16.msra.mxu0 0
    %736 = vmatprep.subr.bf16.mxu0 0
    %737 = vmatpush1.bf16.msra.mxu0 0
    %738 = vmatprep.subr.bf16.mxu0 0
    %739 = vmatpush1.bf16.msra.mxu0 0
    %740 = vmatprep.subr.bf16.mxu0 0
    %741 = vmatpush1.bf16.msra.mxu0 0
    %742 = vmatprep.subr.bf16.mxu0 0
    %743 = vmatpush1.bf16.msra.mxu0 0
    %744 = vmatprep.subr.bf16.mxu0 0
    %745 = vmatpush1.bf16.msra.mxu0 0
    %746 = vmatprep.subr.bf16.mxu0 0
    %747 = vmatpush1.bf16.msra.mxu0 0
    %748 = vmatprep.subr.bf16.mxu0 0
    %749 = vmatpush1.bf16.msra.mxu0 0
    %750 = vmatprep.subr.bf16.mxu0 0
    %751 = vmatpush1.bf16.msra.mxu0 0
    %752 = vmatprep.subr.bf16.mxu0 0
    %753 = vmatpush1.bf16.msra.mxu0 0
    %754 = vmatprep.mubr.bf16.mxu0 0
    %755 = vmatmul.mubr.bf16.gmra.mrb[0].mxu0 %v714
    %v756 = vpop.f32.mrb[0].mxu0
    %v757 = vadd.f32 0.0, %v756
    %v758 = vpop.f32.mrb[0].mxu0
    %v759 = vpop.f32.mrb[0].mxu0
    %v760 = vadd.f32 0.0, %v759
    %v761 = vpop.f32.mrb[0].mxu0
    %762 = vmatprep.mubr.bf16.mxu0 0
    %763 = vmatmul.mubr.bf16.gmra.mrb[0].mxu0 %v717
    %v764 = vpop.f32.mrb[0].mxu0
    %v765 = vadd.f32 0.0, %v764
    %v766 = vpop.f32.mrb[0].mxu0
    %v767 = vpop.f32.mrb[0].mxu0
    %v768 = vadd.f32 0.0, %v767
    %v769 = vpop.f32.mrb[0].mxu0
    %770 = vdwg.mxu0
    %s771 = scalar_lea.vmem [#allocation2], 32
    %v772 = vld [vmem:[%s771] sm:$0xff]
    %v773 = vld [vmem:[%s771 + $0x8] sm:$0xff]
    %v774 = vld [vmem:[%s771 + $0x10] sm:$0xff]
    %v775 = vld [vmem:[%s771 + $0x18] sm:$0xff]
    %v776 = vpack.c.bf16 %v760, %v757
    %v777 = vpack.c.bf16 %v768, %v765
    %v778 = vld [vmem:[%s2] sm:$0xf]
    %v779 = vld [vmem:[%s2 + $0x4] sm:$0xf]
    %v780 = vld [vmem:[%s2 + $0x8] sm:$0xf]
    %v781 = vld [vmem:[%s2 + $0xc] sm:$0xf]
    %v786 = vunpack.c.l.b16 %v778
    %v787 = vunpack.c.l.b16 %v779
    %v788 = vunpack.c.l.b16 %v780
    %v789 = vunpack.c.l.b16 %v781
    %v790 = vpack.c.b16 %v787, %v786
    %v791 = vpack.c.b16 %v789, %v788
    %v793 = vsel %vm135, %v776, 0
    %v796 = vsel %vm135, %v777, 0
    %v799 = vsel %vm135, %v790, 0
    %v802 = vsel %vm135, %v791, 0
    %804 = vmatprep.subr.bf16.mxu0 0
    %805 = vmatpush1.bf16.xpose.msra.mxu0 %v799
    %806 = vmatprep.subr.bf16.mxu0 0
    %807 = vmatpush1.bf16.xpose.msra.mxu0 %v802
    %808 = vmatprep.subr.bf16.mxu0 0
    %809 = vmatpush1.bf16.xpose.msra.mxu0 0
    %810 = vmatprep.subr.bf16.mxu0 0
    %811 = vmatpush1.bf16.xpose.msra.mxu0 0
    %812 = vmatprep.subr.bf16.mxu0 0
    %813 = vmatpush1.bf16.xpose.msra.mxu0 0
    %814 = vmatprep.subr.bf16.mxu0 0
    %815 = vmatpush1.bf16.xpose.msra.mxu0 0
    %816 = vmatprep.subr.bf16.mxu0 0
    %817 = vmatpush1.bf16.xpose.msra.mxu0 0
    %818 = vmatprep.subr.bf16.mxu0 0
    %819 = vmatpush1.bf16.xpose.msra.mxu0 0
    %820 = vmatprep.subr.bf16.mxu0 0
    %821 = vmatpush1.bf16.xpose.msra.mxu0 0
    %822 = vmatprep.subr.bf16.mxu0 0
    %823 = vmatpush1.bf16.xpose.msra.mxu0 0
    %824 = vmatprep.subr.bf16.mxu0 0
    %825 = vmatpush1.bf16.xpose.msra.mxu0 0
    %826 = vmatprep.subr.bf16.mxu0 0
    %827 = vmatpush1.bf16.xpose.msra.mxu0 0
    %828 = vmatprep.subr.bf16.mxu0 0
    %829 = vmatpush1.bf16.xpose.msra.mxu0 0
    %830 = vmatprep.subr.bf16.mxu0 0
    %831 = vmatpush1.bf16.xpose.msra.mxu0 0
    %832 = vmatprep.subr.bf16.mxu0 0
    %833 = vmatpush1.bf16.xpose.msra.mxu0 0
    %834 = vmatprep.subr.bf16.mxu0 0
    %835 = vmatpush1.bf16.xpose.msra.mxu0 0
    %836 = vmatprep.mubr.bf16.mxu0 0
    %837 = vmatmul.mubr.bf16.gmra.mrb[0].mxu0 %v793
    %v838 = vpop.f32.mrb[0].mxu0
    %v839 = vadd.f32 0.0, %v838
    %v840 = vpop.f32.mrb[0].mxu0
    %v841 = vpop.f32.mrb[0].mxu0
    %v842 = vadd.f32 0.0, %v841
    %v843 = vpop.f32.mrb[0].mxu0
    %844 = vmatprep.mubr.bf16.mxu0 0
    %845 = vmatmul.mubr.bf16.gmra.mrb[0].mxu0 %v796
    %v846 = vpop.f32.mrb[0].mxu0
    %v847 = vadd.f32 0.0, %v846
    %v848 = vpop.f32.mrb[0].mxu0
    %v849 = vpop.f32.mrb[0].mxu0
    %v850 = vadd.f32 0.0, %v849
    %v851 = vpop.f32.mrb[0].mxu0
    %852 = vdwg.mxu0
    %v853 = vadd.f32 %v772, %v839
    %v854 = vadd.f32 %v773, %v842
    %v855 = vadd.f32 %v774, %v847
    %v856 = vadd.f32 %v775, %v850
    %857 = vst.msk [vmem:[%s771] sm:$0xff] %vm201, %v853
    %858 = vst.msk [vmem:[%s771 + $0x8] sm:$0xff] %vm201, %v854
    %859 = vst.msk [vmem:[%s771 + $0x10] sm:$0xff] %vm201, %v855
    %860 = vst.msk [vmem:[%s771 + $0x18] sm:$0xff] %vm201, %v856
    %v861 = vld [vmem:[%s206] sm:$0xf]
    %v862 = vld [vmem:[%s206 + $0x4] sm:$0xf]
    %v863 = vld [vmem:[%s206 + $0x8] sm:$0xf]
    %v864 = vld [vmem:[%s206 + $0xc] sm:$0xf]
    %v869 = vunpack.c.l.b16 %v861
    %v870 = vunpack.c.l.b16 %v862
    %v871 = vunpack.c.l.b16 %v863
    %v872 = vunpack.c.l.b16 %v864
    %v873 = vpack.c.b16 %v870, %v869
    %v874 = vpack.c.b16 %v872, %v871
    %v876 = vsel %vm55, %v873, 0
    %v879 = vsel %vm55, %v874, 0
    %881 = vmatprep.subr.bf16.mxu0 0
    %882 = vmatpush1.bf16.msra.mxu0 %v710
    %883 = vmatprep.subr.bf16.mxu0 0
    %884 = vmatpush1.bf16.msra.mxu0 %v720
    %885 = vmatprep.subr.bf16.mxu0 0
    %886 = vmatpush1.bf16.msra.mxu0 0
    %887 = vmatprep.subr.bf16.mxu0 0
    %888 = vmatpush1.bf16.msra.mxu0 0
    %889 = vmatprep.subr.bf16.mxu0 0
    %890 = vmatpush1.bf16.msra.mxu0 0
    %891 = vmatprep.subr.bf16.mxu0 0
    %892 = vmatpush1.bf16.msra.mxu0 0
    %893 = vmatprep.subr.bf16.mxu0 0
    %894 = vmatpush1.bf16.msra.mxu0 0
    %895 = vmatprep.subr.bf16.mxu0 0
    %896 = vmatpush1.bf16.msra.mxu0 0
    %897 = vmatprep.subr.bf16.mxu0 0
    %898 = vmatpush1.bf16.msra.mxu0 0
    %899 = vmatprep.subr.bf16.mxu0 0
    %900 = vmatpush1.bf16.msra.mxu0 0
    %901 = vmatprep.subr.bf16.mxu0 0
    %902 = vmatpush1.bf16.msra.mxu0 0
    %903 = vmatprep.subr.bf16.mxu0 0
    %904 = vmatpush1.bf16.msra.mxu0 0
    %905 = vmatprep.subr.bf16.mxu0 0
    %906 = vmatpush1.bf16.msra.mxu0 0
    %907 = vmatprep.subr.bf16.mxu0 0
    %908 = vmatpush1.bf16.msra.mxu0 0
    %909 = vmatprep.subr.bf16.mxu0 0
    %910 = vmatpush1.bf16.msra.mxu0 0
    %911 = vmatprep.subr.bf16.mxu0 0
    %912 = vmatpush1.bf16.msra.mxu0 0
    %913 = vmatprep.mubr.bf16.mxu0 0
    %914 = vmatmul.mubr.bf16.gmra.mrb[0].mxu0 %v876
    %v915 = vpop.f32.mrb[0].mxu0
    %v916 = vadd.f32 0.0, %v915
    %v917 = vpop.f32.mrb[0].mxu0
    %v918 = vpop.f32.mrb[0].mxu0
    %v919 = vadd.f32 0.0, %v918
    %v920 = vpop.f32.mrb[0].mxu0
    %921 = vmatprep.mubr.bf16.mxu0 0
    %922 = vmatmul.mubr.bf16.gmra.mrb[0].mxu0 %v879
    %v923 = vpop.f32.mrb[0].mxu0
    %v924 = vadd.f32 0.0, %v923
    %v925 = vpop.f32.mrb[0].mxu0
    %v926 = vpop.f32.mrb[0].mxu0
    %v927 = vadd.f32 0.0, %v926
    %v928 = vpop.f32.mrb[0].mxu0
    %929 = vdwg.mxu0
    %v930 = vld [vmem:[%s771] sm:$0xff]
    %v931 = vld [vmem:[%s771 + $0x8] sm:$0xff]
    %v932 = vld [vmem:[%s771 + $0x10] sm:$0xff]
    %v933 = vld [vmem:[%s771 + $0x18] sm:$0xff]
    %v934 = vpack.c.bf16 %v919, %v916
    %v935 = vpack.c.bf16 %v927, %v924
    %v936 = vld [vmem:[%s282] sm:$0xf]
    %v937 = vld [vmem:[%s282 + $0x4] sm:$0xf]
    %v938 = vld [vmem:[%s282 + $0x8] sm:$0xf]
    %v939 = vld [vmem:[%s282 + $0xc] sm:$0xf]
    %v944 = vunpack.c.l.b16 %v936
    %v945 = vunpack.c.l.b16 %v937
    %v946 = vunpack.c.l.b16 %v938
    %v947 = vunpack.c.l.b16 %v939
    %v948 = vpack.c.b16 %v945, %v944
    %v949 = vpack.c.b16 %v947, %v946
    %v951 = vsel %vm135, %v934, 0
    %v954 = vsel %vm135, %v935, 0
    %v957 = vsel %vm135, %v948, 0
    %v960 = vsel %vm135, %v949, 0
    %962 = vmatprep.subr.bf16.mxu0 0
    %963 = vmatpush1.bf16.xpose.msra.mxu0 %v957
    %964 = vmatprep.subr.bf16.mxu0 0
    %965 = vmatpush1.bf16.xpose.msra.mxu0 %v960
    %966 = vmatprep.subr.bf16.mxu0 0
    %967 = vmatpush1.bf16.xpose.msra.mxu0 0
    %968 = vmatprep.subr.bf16.mxu0 0
    %969 = vmatpush1.bf16.xpose.msra.mxu0 0
    %970 = vmatprep.subr.bf16.mxu0 0
    %971 = vmatpush1.bf16.xpose.msra.mxu0 0
    %972 = vmatprep.subr.bf16.mxu0 0
    %973 = vmatpush1.bf16.xpose.msra.mxu0 0
    %974 = vmatprep.subr.bf16.mxu0 0
    %975 = vmatpush1.bf16.xpose.msra.mxu0 0
    %976 = vmatprep.subr.bf16.mxu0 0
    %977 = vmatpush1.bf16.xpose.msra.mxu0 0
    %978 = vmatprep.subr.bf16.mxu0 0
    %979 = vmatpush1.bf16.xpose.msra.mxu0 0
    %980 = vmatprep.subr.bf16.mxu0 0
    %981 = vmatpush1.bf16.xpose.msra.mxu0 0
    %982 = vmatprep.subr.bf16.mxu0 0
    %983 = vmatpush1.bf16.xpose.msra.mxu0 0
    %984 = vmatprep.subr.bf16.mxu0 0
    %985 = vmatpush1.bf16.xpose.msra.mxu0 0
    %986 = vmatprep.subr.bf16.mxu0 0
    %987 = vmatpush1.bf16.xpose.msra.mxu0 0
    %988 = vmatprep.subr.bf16.mxu0 0
    %989 = vmatpush1.bf16.xpose.msra.mxu0 0
    %990 = vmatprep.subr.bf16.mxu0 0
    %991 = vmatpush1.bf16.xpose.msra.mxu0 0
    %992 = vmatprep.subr.bf16.mxu0 0
    %993 = vmatpush1.bf16.xpose.msra.mxu0 0
    %994 = vmatprep.mubr.bf16.mxu0 0
    %995 = vmatmul.mubr.bf16.gmra.mrb[0].mxu0 %v951
    %v996 = vpop.f32.mrb[0].mxu0
    %v997 = vadd.f32 0.0, %v996
    %v998 = vpop.f32.mrb[0].mxu0
    %v999 = vpop.f32.mrb[0].mxu0
    %v1000 = vadd.f32 0.0, %v999
    %v1001 = vpop.f32.mrb[0].mxu0
    %1002 = vmatprep.mubr.bf16.mxu0 0
    %1003 = vmatmul.mubr.bf16.gmra.mrb[0].mxu0 %v954
    %v1004 = vpop.f32.mrb[0].mxu0
    %v1005 = vadd.f32 0.0, %v1004
    %v1006 = vpop.f32.mrb[0].mxu0
    %v1007 = vpop.f32.mrb[0].mxu0
    %v1008 = vadd.f32 0.0, %v1007
    %v1009 = vpop.f32.mrb[0].mxu0
    %1010 = vdwg.mxu0
    %v1011 = vadd.f32 %v930, %v997
    %v1012 = vadd.f32 %v931, %v1000
    %v1013 = vadd.f32 %v932, %v1005
    %v1014 = vadd.f32 %v933, %v1008
    %1015 = vst.msk [vmem:[%s771] sm:$0xff] %vm201, %v1011
    %1016 = vst.msk [vmem:[%s771 + $0x8] sm:$0xff] %vm201, %v1012
    %1017 = vst.msk [vmem:[%s771 + $0x10] sm:$0xff] %vm201, %v1013
    %1018 = vst.msk [vmem:[%s771 + $0x18] sm:$0xff] %vm201, %v1014
    %v1019 = vld [vmem:[%s366] sm:$0xf]
    %v1020 = vld [vmem:[%s366 + $0x4] sm:$0xf]
    %v1021 = vld [vmem:[%s366 + $0x8] sm:$0xf]
    %v1022 = vld [vmem:[%s366 + $0xc] sm:$0xf]
    %v1027 = vunpack.c.l.b16 %v1019
    %v1028 = vunpack.c.l.b16 %v1020
    %v1029 = vunpack.c.l.b16 %v1021
    %v1030 = vunpack.c.l.b16 %v1022
    %v1031 = vpack.c.b16 %v1028, %v1027
    %v1032 = vpack.c.b16 %v1030, %v1029
    %v1034 = vsel %vm55, %v1031, 0
    %v1037 = vsel %vm55, %v1032, 0
    %1039 = vmatprep.subr.bf16.mxu0 0
    %1040 = vmatpush1.bf16.msra.mxu0 %v710
    %1041 = vmatprep.subr.bf16.mxu0 0
    %1042 = vmatpush1.bf16.msra.mxu0 %v720
    %1043 = vmatprep.subr.bf16.mxu0 0
    %1044 = vmatpush1.bf16.msra.mxu0 0
    %1045 = vmatprep.subr.bf16.mxu0 0
    %1046 = vmatpush1.bf16.msra.mxu0 0
    %1047 = vmatprep.subr.bf16.mxu0 0
    %1048 = vmatpush1.bf16.msra.mxu0 0
    %1049 = vmatprep.subr.bf16.mxu0 0
    %1050 = vmatpush1.bf16.msra.mxu0 0
    %1051 = vmatprep.subr.bf16.mxu0 0
    %1052 = vmatpush1.bf16.msra.mxu0 0
    %1053 = vmatprep.subr.bf16.mxu0 0
    %1054 = vmatpush1.bf16.msra.mxu0 0
    %1055 = vmatprep.subr.bf16.mxu0 0
    %1056 = vmatpush1.bf16.msra.mxu0 0
    %1057 = vmatprep.subr.bf16.mxu0 0
    %1058 = vmatpush1.bf16.msra.mxu0 0
    %1059 = vmatprep.subr.bf16.mxu0 0
    %1060 = vmatpush1.bf16.msra.mxu0 0
    %1061 = vmatprep.subr.bf16.mxu0 0
    %1062 = vmatpush1.bf16.msra.mxu0 0
    %1063 = vmatprep.subr.bf16.mxu0 0
    %1064 = vmatpush1.bf16.msra.mxu0 0
    %1065 = vmatprep.subr.bf16.mxu0 0
    %1066 = vmatpush1.bf16.msra.mxu0 0
    %1067 = vmatprep.subr.bf16.mxu0 0
    %1068 = vmatpush1.bf16.msra.mxu0 0
    %1069 = vmatprep.subr.bf16.mxu0 0
    %1070 = vmatpush1.bf16.msra.mxu0 0
    %1071 = vmatprep.mubr.bf16.mxu0 0
    %1072 = vmatmul.mubr.bf16.gmra.mrb[0].mxu0 %v1034
    %v1073 = vpop.f32.mrb[0].mxu0
    %v1074 = vadd.f32 0.0, %v1073
    %v1075 = vpop.f32.mrb[0].mxu0
    %v1076 = vpop.f32.mrb[0].mxu0
    %v1077 = vadd.f32 0.0, %v1076
    %v1078 = vpop.f32.mrb[0].mxu0
    %1079 = vmatprep.mubr.bf16.mxu0 0
    %1080 = vmatmul.mubr.bf16.gmra.mrb[0].mxu0 %v1037
    %v1081 = vpop.f32.mrb[0].mxu0
    %v1082 = vadd.f32 0.0, %v1081
    %v1083 = vpop.f32.mrb[0].mxu0
    %v1084 = vpop.f32.mrb[0].mxu0
    %v1085 = vadd.f32 0.0, %v1084
    %v1086 = vpop.f32.mrb[0].mxu0
    %1087 = vdwg.mxu0
    %v1088 = vld [vmem:[%s771] sm:$0xff]
    %v1089 = vld [vmem:[%s771 + $0x8] sm:$0xff]
    %v1090 = vld [vmem:[%s771 + $0x10] sm:$0xff]
    %v1091 = vld [vmem:[%s771 + $0x18] sm:$0xff]
    %v1092 = vpack.c.bf16 %v1077, %v1074
    %v1093 = vpack.c.bf16 %v1085, %v1082
    %v1094 = vld [vmem:[%s442] sm:$0xf]
    %v1095 = vld [vmem:[%s442 + $0x4] sm:$0xf]
    %v1096 = vld [vmem:[%s442 + $0x8] sm:$0xf]
    %v1097 = vld [vmem:[%s442 + $0xc] sm:$0xf]
    %v1102 = vunpack.c.l.b16 %v1094
    %v1103 = vunpack.c.l.b16 %v1095
    %v1104 = vunpack.c.l.b16 %v1096
    %v1105 = vunpack.c.l.b16 %v1097
    %v1106 = vpack.c.b16 %v1103, %v1102
    %v1107 = vpack.c.b16 %v1105, %v1104
    %v1109 = vsel %vm135, %v1092, 0
    %v1112 = vsel %vm135, %v1093, 0
    %v1115 = vsel %vm135, %v1106, 0
    %v1118 = vsel %vm135, %v1107, 0
    %1120 = vmatprep.subr.bf16.mxu0 0
    %1121 = vmatpush1.bf16.xpose.msra.mxu0 %v1115
    %1122 = vmatprep.subr.bf16.mxu0 0
    %1123 = vmatpush1.bf16.xpose.msra.mxu0 %v1118
    %1124 = vmatprep.subr.bf16.mxu0 0
    %1125 = vmatpush1.bf16.xpose.msra.mxu0 0
    %1126 = vmatprep.subr.bf16.mxu0 0
    %1127 = vmatpush1.bf16.xpose.msra.mxu0 0
    %1128 = vmatprep.subr.bf16.mxu0 0
    %1129 = vmatpush1.bf16.xpose.msra.mxu0 0
    %1130 = vmatprep.subr.bf16.mxu0 0
    %1131 = vmatpush1.bf16.xpose.msra.mxu0 0
    %1132 = vmatprep.subr.bf16.mxu0 0
    %1133 = vmatpush1.bf16.xpose.msra.mxu0 0
    %1134 = vmatprep.subr.bf16.mxu0 0
    %1135 = vmatpush1.bf16.xpose.msra.mxu0 0
    %1136 = vmatprep.subr.bf16.mxu0 0
    %1137 = vmatpush1.bf16.xpose.msra.mxu0 0
    %1138 = vmatprep.subr.bf16.mxu0 0
    %1139 = vmatpush1.bf16.xpose.msra.mxu0 0
    %1140 = vmatprep.subr.bf16.mxu0 0
    %1141 = vmatpush1.bf16.xpose.msra.mxu0 0
    %1142 = vmatprep.subr.bf16.mxu0 0
    %1143 = vmatpush1.bf16.xpose.msra.mxu0 0
    %1144 = vmatprep.subr.bf16.mxu0 0
    %1145 = vmatpush1.bf16.xpose.msra.mxu0 0
    %1146 = vmatprep.subr.bf16.mxu0 0
    %1147 = vmatpush1.bf16.xpose.msra.mxu0 0
    %1148 = vmatprep.subr.bf16.mxu0 0
    %1149 = vmatpush1.bf16.xpose.msra.mxu0 0
    %1150 = vmatprep.subr.bf16.mxu0 0
    %1151 = vmatpush1.bf16.xpose.msra.mxu0 0
    %1152 = vmatprep.mubr.bf16.mxu0 0
    %1153 = vmatmul.mubr.bf16.gmra.mrb[0].mxu0 %v1109
    %v1154 = vpop.f32.mrb[0].mxu0
    %v1155 = vadd.f32 0.0, %v1154
    %v1156 = vpop.f32.mrb[0].mxu0
    %v1157 = vpop.f32.mrb[0].mxu0
    %v1158 = vadd.f32 0.0, %v1157
    %v1159 = vpop.f32.mrb[0].mxu0
    %1160 = vmatprep.mubr.bf16.mxu0 0
    %1161 = vmatmul.mubr.bf16.gmra.mrb[0].mxu0 %v1112
    %v1162 = vpop.f32.mrb[0].mxu0
    %v1163 = vadd.f32 0.0, %v1162
    %v1164 = vpop.f32.mrb[0].mxu0
    %v1165 = vpop.f32.mrb[0].mxu0
    %v1166 = vadd.f32 0.0, %v1165
    %v1167 = vpop.f32.mrb[0].mxu0
    %1168 = vdwg.mxu0
    %v1169 = vadd.f32 %v1088, %v1155
    %v1170 = vadd.f32 %v1089, %v1158
    %v1171 = vadd.f32 %v1090, %v1163
    %v1172 = vadd.f32 %v1091, %v1166
    %1173 = vst.msk [vmem:[%s771] sm:$0xff] %vm201, %v1169
    %1174 = vst.msk [vmem:[%s771 + $0x8] sm:$0xff] %vm201, %v1170
    %1175 = vst.msk [vmem:[%s771 + $0x10] sm:$0xff] %vm201, %v1171
    %1176 = vst.msk [vmem:[%s771 + $0x18] sm:$0xff] %vm201, %v1172
    %v1177 = vld [vmem:[%s526] sm:$0xf]
    %v1178 = vld [vmem:[%s526 + $0x4] sm:$0xf]
    %v1179 = vld [vmem:[%s526 + $0x8] sm:$0xf]
    %v1180 = vld [vmem:[%s526 + $0xc] sm:$0xf]
    %v1185 = vunpack.c.l.b16 %v1177
    %v1186 = vunpack.c.l.b16 %v1178
    %v1187 = vunpack.c.l.b16 %v1179
    %v1188 = vunpack.c.l.b16 %v1180
    %v1189 = vpack.c.b16 %v1186, %v1185
    %v1190 = vpack.c.b16 %v1188, %v1187
    %v1192 = vsel %vm55, %v1189, 0
    %v1195 = vsel %vm55, %v1190, 0
    %1197 = vmatprep.subr.bf16.mxu0 0
    %1198 = vmatpush1.bf16.msra.mxu0 %v710
    %1199 = vmatprep.subr.bf16.mxu0 0
    %1200 = vmatpush1.bf16.msra.mxu0 %v720
    %1201 = vmatprep.subr.bf16.mxu0 0
    %1202 = vmatpush1.bf16.msra.mxu0 0
    %1203 = vmatprep.subr.bf16.mxu0 0
    %1204 = vmatpush1.bf16.msra.mxu0 0
    %1205 = vmatprep.subr.bf16.mxu0 0
    %1206 = vmatpush1.bf16.msra.mxu0 0
    %1207 = vmatprep.subr.bf16.mxu0 0
    %1208 = vmatpush1.bf16.msra.mxu0 0
    %1209 = vmatprep.subr.bf16.mxu0 0
    %1210 = vmatpush1.bf16.msra.mxu0 0
    %1211 = vmatprep.subr.bf16.mxu0 0
    %1212 = vmatpush1.bf16.msra.mxu0 0
    %1213 = vmatprep.subr.bf16.mxu0 0
    %1214 = vmatpush1.bf16.msra.mxu0 0
    %1215 = vmatprep.subr.bf16.mxu0 0
    %1216 = vmatpush1.bf16.msra.mxu0 0
    %1217 = vmatprep.subr.bf16.mxu0 0
    %1218 = vmatpush1.bf16.msra.mxu0 0
    %1219 = vmatprep.subr.bf16.mxu0 0
    %1220 = vmatpush1.bf16.msra.mxu0 0
    %1221 = vmatprep.subr.bf16.mxu0 0
    %1222 = vmatpush1.bf16.msra.mxu0 0
    %1223 = vmatprep.subr.bf16.mxu0 0
    %1224 = vmatpush1.bf16.msra.mxu0 0
    %1225 = vmatprep.subr.bf16.mxu0 0
    %1226 = vmatpush1.bf16.msra.mxu0 0
    %1227 = vmatprep.subr.bf16.mxu0 0
    %1228 = vmatpush1.bf16.msra.mxu0 0
    %1229 = vmatprep.mubr.bf16.mxu0 0
    %1230 = vmatmul.mubr.bf16.gmra.mrb[0].mxu0 %v1192
    %v1231 = vpop.f32.mrb[0].mxu0
    %v1232 = vadd.f32 0.0, %v1231
    %v1233 = vpop.f32.mrb[0].mxu0
    %v1234 = vpop.f32.mrb[0].mxu0
    %v1235 = vadd.f32 0.0, %v1234
    %v1236 = vpop.f32.mrb[0].mxu0
    %1237 = vmatprep.mubr.bf16.mxu0 0
    %1238 = vmatmul.mubr.bf16.gmra.mrb[0].mxu0 %v1195
    %v1239 = vpop.f32.mrb[0].mxu0
    %v1240 = vadd.f32 0.0, %v1239
    %v1241 = vpop.f32.mrb[0].mxu0
    %v1242 = vpop.f32.mrb[0].mxu0
    %v1243 = vadd.f32 0.0, %v1242
    %v1244 = vpop.f32.mrb[0].mxu0
    %1245 = vdwg.mxu0
    %v1246 = vld [vmem:[%s771] sm:$0xff]
    %v1247 = vld [vmem:[%s771 + $0x8] sm:$0xff]
    %v1248 = vld [vmem:[%s771 + $0x10] sm:$0xff]
    %v1249 = vld [vmem:[%s771 + $0x18] sm:$0xff]
    %v1250 = vpack.c.bf16 %v1235, %v1232
    %v1251 = vpack.c.bf16 %v1243, %v1240
    %v1252 = vld [vmem:[%s602] sm:$0xf]
    %v1253 = vld [vmem:[%s602 + $0x4] sm:$0xf]
    %v1254 = vld [vmem:[%s602 + $0x8] sm:$0xf]
    %v1255 = vld [vmem:[%s602 + $0xc] sm:$0xf]
    %v1260 = vunpack.c.l.b16 %v1252
    %v1261 = vunpack.c.l.b16 %v1253
    %v1262 = vunpack.c.l.b16 %v1254
    %v1263 = vunpack.c.l.b16 %v1255
    %v1264 = vpack.c.b16 %v1261, %v1260
    %v1265 = vpack.c.b16 %v1263, %v1262
    %v1267 = vsel %vm135, %v1250, 0
    %v1270 = vsel %vm135, %v1251, 0
    %v1273 = vsel %vm135, %v1264, 0
    %v1276 = vsel %vm135, %v1265, 0
    %1278 = vmatprep.subr.bf16.mxu0 0
    %1279 = vmatpush1.bf16.xpose.msra.mxu0 %v1273
    %1280 = vmatprep.subr.bf16.mxu0 0
    %1281 = vmatpush1.bf16.xpose.msra.mxu0 %v1276
    %1282 = vmatprep.subr.bf16.mxu0 0
    %1283 = vmatpush1.bf16.xpose.msra.mxu0 0
    %1284 = vmatprep.subr.bf16.mxu0 0
    %1285 = vmatpush1.bf16.xpose.msra.mxu0 0
    %1286 = vmatprep.subr.bf16.mxu0 0
    %1287 = vmatpush1.bf16.xpose.msra.mxu0 0
    %1288 = vmatprep.subr.bf16.mxu0 0
    %1289 = vmatpush1.bf16.xpose.msra.mxu0 0
    %1290 = vmatprep.subr.bf16.mxu0 0
    %1291 = vmatpush1.bf16.xpose.msra.mxu0 0
    %1292 = vmatprep.subr.bf16.mxu0 0
    %1293 = vmatpush1.bf16.xpose.msra.mxu0 0
    %1294 = vmatprep.subr.bf16.mxu0 0
    %1295 = vmatpush1.bf16.xpose.msra.mxu0 0
    %1296 = vmatprep.subr.bf16.mxu0 0
    %1297 = vmatpush1.bf16.xpose.msra.mxu0 0
    %1298 = vmatprep.subr.bf16.mxu0 0
    %1299 = vmatpush1.bf16.xpose.msra.mxu0 0
    %1300 = vmatprep.subr.bf16.mxu0 0
    %1301 = vmatpush1.bf16.xpose.msra.mxu0 0
    %1302 = vmatprep.subr.bf16.mxu0 0
    %1303 = vmatpush1.bf16.xpose.msra.mxu0 0
    %1304 = vmatprep.subr.bf16.mxu0 0
    %1305 = vmatpush1.bf16.xpose.msra.mxu0 0
    %1306 = vmatprep.subr.bf16.mxu0 0
    %1307 = vmatpush1.bf16.xpose.msra.mxu0 0
    %1308 = vmatprep.subr.bf16.mxu0 0
    %1309 = vmatpush1.bf16.xpose.msra.mxu0 0
    %1310 = vmatprep.mubr.bf16.mxu0 0
    %1311 = vmatmul.mubr.bf16.gmra.mrb[0].mxu0 %v1267
    %v1312 = vpop.f32.mrb[0].mxu0
    %v1313 = vadd.f32 0.0, %v1312
    %v1314 = vpop.f32.mrb[0].mxu0
    %v1315 = vpop.f32.mrb[0].mxu0
    %v1316 = vadd.f32 0.0, %v1315
    %v1317 = vpop.f32.mrb[0].mxu0
    %1318 = vmatprep.mubr.bf16.mxu0 0
    %1319 = vmatmul.mubr.bf16.gmra.mrb[0].mxu0 %v1270
    %v1320 = vpop.f32.mrb[0].mxu0
    %v1321 = vadd.f32 0.0, %v1320
    %v1322 = vpop.f32.mrb[0].mxu0
    %v1323 = vpop.f32.mrb[0].mxu0
    %v1324 = vadd.f32 0.0, %v1323
    %v1325 = vpop.f32.mrb[0].mxu0
    %1326 = vdwg.mxu0
    %v1327 = vadd.f32 %v1246, %v1313
    %v1328 = vadd.f32 %v1247, %v1316
    %v1329 = vadd.f32 %v1248, %v1321
    %v1330 = vadd.f32 %v1249, %v1324
    %1331 = vst.msk [vmem:[%s771] sm:$0xff] %vm201, %v1327
    %1332 = vst.msk [vmem:[%s771 + $0x8] sm:$0xff] %vm201, %v1328
    %1333 = vst.msk [vmem:[%s771 + $0x10] sm:$0xff] %vm201, %v1329
    %1334 = vst.msk [vmem:[%s771 + $0x18] sm:$0xff] %vm201, %v1330
    // Predicated region
    $region18: #{tpu_custom_call.1} parent=1 // pred_check
      _
    $region19: #{tpu_custom_call.1} parent=1 // pred_check_branch
      %1336 = sbr.rel (0) target = $region21
    $region20: #{tpu_custom_call.1} parent=1 // pred_region
      %s1338 = ssub.s32 1024, 1024
      %1339 = vsyncadd [#allocation3], %s1338
      %s1340 = sshll.u32 [#allocation2], 4
      %s1341 = int_to_ptr.vmem [resolvable:$true] %s1340
      %1346 = dma.vmem_to_hbm [thread:$0]  %s1341, 1024, %s3, [#allocation3], 128, 128, 8
    $region21: #{tpu_custom_call.1} parent=1 // pred_fallthru
      _
    // Predicated region
    $region22: #{tpu_custom_call.1} parent=1 // pred_check
      _
    $region23: #{tpu_custom_call.1} parent=1 // pred_check_branch
      %1348 = sbr.rel (0) target = $region25
    $region24: #{tpu_custom_call.1} parent=1 // pred_region
      %1349 = dma.done [#allocation3], 1024
    $region25: #{tpu_custom_call.1} parent=1 // pred_fallthru
      _
    %1350 = vsyncpa [#allocation3], 1

</llo_original>
